<compile_context>
chip_gen: v5e
topology: v5e:2x2
jax: 0.10.0
libtpu: 0.0.40
codegen_flags: <defaults>
</compile_context>

<pallas_src>
import functools

import numpy as np
import jax
import jax.numpy as jnp
from jax import lax
from jax.experimental import pallas as pl
from jax.experimental.pallas import tpu as pltpu

EPS = 1e-5
_NB = 128  # lane width used for the tiny in-kernel SE-MLP matmuls


def _elu(x):
    # clamp the exp argument so no inf temporaries / wasted EUP work for x > 0
    return jnp.where(x > 0, x, jnp.exp(jnp.minimum(x, 0.0)) - 1.0)


def _sigmoid(x):
    return 1.0 / (1.0 + jnp.exp(-x))


def _fold_bn(g, b, rm, rv):
    s = g / jnp.sqrt(rv + EPS)
    return s, b - rm * s


def _interp_matrix(out_size, in_size):
    """1-D weights of PyTorch Upsample(mode='trilinear', align_corners=False)."""
    scale = in_size / out_size
    dst = np.arange(out_size)
    src = np.maximum(scale * (dst + 0.5) - 0.5, 0.0)
    i0 = np.minimum(np.floor(src).astype(np.int64), in_size - 1)
    i1 = np.minimum(i0 + 1, in_size - 1)
    l1 = src - i0
    m = np.zeros((out_size, in_size), np.float32)
    m[dst, i0] += (1.0 - l1)
    m[dst, i1] += l1
    return m


def _pick_chunk(n, c, max_chunk=None, vmem_budget=12 * 1024 * 1024):
    """Largest lane-dense (multiple-of-128) divisor of n whose streamed tiles
    (x, up, out -- all f32, double-buffered) fit in `vmem_budget`."""
    bytes_per_lane = (2 * c + 1) * 2 * 4
    cap = max(128, vmem_budget // bytes_per_lane)
    if max_chunk is not None:
        cap = min(cap, max_chunk)
    if n <= cap:
        return n
    k = (cap // 128) * 128
    while k >= 128:
        if n % k == 0:
            return k
        k -= 128
    return n  # fall back to the full (un-chunked) spatial axis


# ---- kernel 1: 1x1x1 conv C->1 (+BN+ELU) via MXU dot, global-mean
#      accumulator across chunks, SE MLP fused into the last-chunk epilogue ---
def _head_kernel(x_ref, w8_ref, shift_ref, w1t_ref, a1_ref, c1_ref,
                 w2t_ref, a2_ref, c2_ref, s_ref, y_ref, acc_ref, *, inv_n):
    k = pl.program_id(1)
    xb = x_ref[0]                                              # (C, chunk)

    @pl.when(k == 0)
    def _():
        acc_ref[...] = jnp.zeros_like(acc_ref)

    # AdaptiveAvgPool3d(1): per-channel partial sums (XLU lane reduction,
    # hidden under the streaming DMA).
    acc_ref[...] += jnp.sum(xb, axis=1, keepdims=True)         # (C, 1)

    # sc[0..2]: 1x1x1 conv C->1 + folded BN as a single MXU matmul.
    # w8 has the weight row replicated to 8 sublanes (native LHS); rows of s8
    # are identical, row 0 is used.
    s8 = jnp.dot(w8_ref[...], xb,
                 preferred_element_type=jnp.float32,
                 precision=lax.Precision.HIGHEST)              # (8, chunk)
    s_ref[0] = _elu(s8[0:1, :] + shift_ref[...])               # (1, chunk)

    # SE MLP (Linear->BN->ELU->Linear->BN->sigmoid) on the finished mean.
    @pl.when(k == pl.num_programs(1) - 1)
    def _():
        mean = acc_ref[...] * inv_n                            # (C, 1)
        meanb = jnp.broadcast_to(mean, (mean.shape[0], _NB))   # (C, NB)
        h = jnp.dot(w1t_ref[...], meanb,
                    preferred_element_type=jnp.float32,
                    precision=lax.Precision.HIGHEST)           # (Cr, NB)
        h = _elu(h * a1_ref[...] + c1_ref[...])
        g = jnp.dot(w2t_ref[...], h,
                    preferred_element_type=jnp.float32,
                    precision=lax.Precision.HIGHEST)           # (C, NB)
        yv = _sigmoid(g * a2_ref[...] + c2_ref[...])           # (C, NB)
        y_ref[0] = yv[:, 0:1]                                  # (C, 1)


# ---- kernel 2: fused gate  out = x * (y + sigmoid(a4*up + d4)) -------------
def _fuse_kernel(x_ref, y_ref, up_ref, a_ref, d_ref, o_ref):
    xb = x_ref[0]                                              # (C, chunk)
    yb = y_ref[0]                                              # (C, 1)
    upb = up_ref[0]                                            # (1, chunk)
    t = a_ref[...] * upb + d_ref[...]                          # (C, chunk)
    # sigmoid via EUP exp + approx reciprocal (divide stays off the VALU).
    z = pl.reciprocal(1.0 + jnp.exp(-t), approx=True)
    o_ref[0] = xb * (yb + z)                                   # x*y + x*z


def se_layer_cs_forward(x, p, max_chunk=None):
    B, C, D, H, W = x.shape
    Hs, Ws = H // 8, W // 8
    HW = H * W
    N = D * HW
    chunk = _pick_chunk(N, C, max_chunk)
    n_chunks = N // chunk
    Cr = p["w_fc1"].shape[1]

    xk = x.reshape(B, C, N)                                    # lane-dense layout

    s1, t1 = _fold_bn(*p["bn_fc1"])
    s2, t2 = _fold_bn(*p["bn_fc2"])
    ssc, tsc = _fold_bn(*p["bn_sc1"])
    s3, t3 = _fold_bn(*p["bn_sc3"])
    s4, t4 = _fold_bn(*p["bn_sc4"])

    # sc[0..2]: Conv3d(C,1,1x1x1) + BN3d(1) folded into effective weight/shift.
    weff8 = jnp.broadcast_to((p["w_sc1"] * ssc[0])[None, :], (8, C))
    shift = (p["b_sc1"][0] * ssc[0] + tsc[0]).reshape(1, 1)

    # fc path (SE MLP) with BN folded; transposed / column-shaped so the whole
    # MLP runs in column space inside the head kernel epilogue.
    w1t = p["w_fc1"].T                                         # (Cr, C)
    a1 = s1.reshape(Cr, 1)
    c1 = (p["b_fc1"] * s1 + t1).reshape(Cr, 1)
    w2t = p["w_fc2"].T                                         # (C, Cr)
    a2 = s2.reshape(C, 1)
    c2 = (p["b_fc2"] * s2 + t2).reshape(C, 1)

    s_flat, y = pl.pallas_call(
        functools.partial(_head_kernel, inv_n=1.0 / float(N)),
        out_shape=(jax.ShapeDtypeStruct((B, 1, N), jnp.float32),
                   jax.ShapeDtypeStruct((B, C, 1), jnp.float32)),
        grid=(B, n_chunks),
        in_specs=[pl.BlockSpec((1, C, chunk), lambda b, k: (b, 0, k)),
                  pl.BlockSpec((8, C), lambda b, k: (0, 0)),
                  pl.BlockSpec((1, 1), lambda b, k: (0, 0)),
                  pl.BlockSpec((Cr, C), lambda b, k: (0, 0)),
                  pl.BlockSpec((Cr, 1), lambda b, k: (0, 0)),
                  pl.BlockSpec((Cr, 1), lambda b, k: (0, 0)),
                  pl.BlockSpec((C, Cr), lambda b, k: (0, 0)),
                  pl.BlockSpec((C, 1), lambda b, k: (0, 0)),
                  pl.BlockSpec((C, 1), lambda b, k: (0, 0))],
        out_specs=(pl.BlockSpec((1, 1, chunk), lambda b, k: (b, 0, k)),
                   pl.BlockSpec((1, C, 1), lambda b, k: (b, 0, 0))),
        scratch_shapes=[pltpu.VMEM((C, 1), jnp.float32)],
        compiler_params=pltpu.CompilerParams(
            dimension_semantics=("parallel", "arbitrary"),
            vmem_limit_bytes=32 * 1024 * 1024),
    )(xk, weff8, shift, w1t, a1, c1, w2t, a2, c2)

    # TODO(synk): tiny mid path (MaxPool3d(1,8,8), replication-padded 3x3x3
    # conv + BN + ELU) and the separable trilinear upsample stay in plain JAX
    # glue -- they touch <= |x|/C of the data volume.  If the up-map HBM round
    # trip ever matters, fold the W-interp matmul back into the fuse kernel
    # (requires a sublane->lane flatten of its (H, W) result).
    s5 = s_flat.reshape(B, 1, D, H, W)
    pooled = s5.reshape(B, 1, D, Hs, 8, Ws, 8).max(axis=(4, 6))
    padded = jnp.pad(pooled, ((0, 0), (0, 0), (1, 1), (1, 1), (1, 1)), mode="edge")
    conv3 = lax.conv_general_dilated(
        padded, p["w_sc3"], (1, 1, 1), "VALID",
        dimension_numbers=("NCDHW", "OIDHW", "NCDHW"))
    mid = _elu(conv3 * s3[0] + t3[0])[:, 0]                    # (B, D, Hs, Ws)

    # separable trilinear upsample (align_corners=False): kilobyte weights
    # instead of the dense (Hs*Ws, H*W) Kronecker matrix.
    uh = jnp.asarray(_interp_matrix(H, Hs))                    # (H, Hs)
    uw = jnp.asarray(_interp_matrix(W, Ws))                    # (W, Ws)
    up = jnp.einsum("hi,bdij,wj->bdhw", uh, mid, uw,
                    precision=lax.Precision.HIGHEST)           # (B, D, H, W)
    up_flat = up.reshape(B, 1, N)

    # sc[6..8]: 1x1x1 conv 1->C + BN + sigmoid folded into per-channel (a, d).
    a4 = (p["w_sc4"] * s4).reshape(C, 1)
    d4 = (p["b_sc4"] * s4 + t4).reshape(C, 1)

    out = pl.pallas_call(
        _fuse_kernel,
        out_shape=jax.ShapeDtypeStruct((B, C, N), jnp.float32),
        grid=(B, n_chunks),
        in_specs=[pl.BlockSpec((1, C, chunk), lambda b, k: (b, 0, k)),
                  pl.BlockSpec((1, C, 1), lambda b, k: (b, 0, 0)),
                  pl.BlockSpec((1, 1, chunk), lambda b, k: (b, 0, k)),
                  pl.BlockSpec((C, 1), lambda b, k: (0, 0)),
                  pl.BlockSpec((C, 1), lambda b, k: (0, 0))],
        out_specs=pl.BlockSpec((1, C, chunk), lambda b, k: (b, 0, k)),
        compiler_params=pltpu.CompilerParams(
            dimension_semantics=("parallel", "parallel"),
            vmem_limit_bytes=32 * 1024 * 1024),
    )(xk, y, up_flat, a4, d4)

    return out.reshape(B, C, D, H, W)


def init_params(key, C, reduction=4):
    Cr = C // reduction
    keys = jax.random.split(key, 12)

    def bn(k, n):
        k1, k2, k3, k4 = jax.random.split(k, 4)
        return (1.0 + 0.1 * jax.random.normal(k1, (n,), jnp.float32),
                0.1 * jax.random.normal(k2, (n,), jnp.float32),
                0.1 * jax.random.normal(k3, (n,), jnp.float32),
                0.5 + jax.random.uniform(k4, (n,), jnp.float32))

    return {
        "w_fc1": 0.3 * jax.random.normal(keys[0], (C, Cr), jnp.float32),
        "b_fc1": 0.1 * jax.random.normal(keys[1], (Cr,), jnp.float32),
        "bn_fc1": bn(keys[2], Cr),
        "w_fc2": 0.3 * jax.random.normal(keys[3], (Cr, C), jnp.float32),
        "b_fc2": 0.1 * jax.random.normal(keys[4], (C,), jnp.float32),
        "bn_fc2": bn(keys[5], C),
        "w_sc1": 0.3 * jax.random.normal(keys[6], (C,), jnp.float32),
        "b_sc1": 0.1 * jax.random.normal(keys[7], (1,), jnp.float32),
        "bn_sc1": bn(keys[8], 1),
        "w_sc3": 0.2 * jax.random.normal(keys[9], (1, 1, 3, 3, 3), jnp.float32),
        "bn_sc3": bn(keys[10], 1),
        "w_sc4": 0.3 * jax.random.normal(keys[11], (C,), jnp.float32),
        "b_sc4": 0.1 * jax.random.normal(jax.random.fold_in(key, 99), (C,), jnp.float32),
        "bn_sc4": bn(jax.random.fold_in(key, 100), C),
    }


def reference_forward(x, p):
    """Pure-JAX reference with unfused BN, matching the PyTorch module math."""
    B, C, D, H, W = x.shape
    Hs, Ws = H // 8, W // 8

    def bn_nd(v, prm, nd):
        g, b, rm, rv = (t.reshape((1, -1) + (1,) * nd) for t in prm)
        return (v - rm) / jnp.sqrt(rv + EPS) * g + b

    y0 = x.mean(axis=(2, 3, 4))
    h = y0 @ p["w_fc1"] + p["b_fc1"]
    h = _elu(bn_nd(h, p["bn_fc1"], 0))
    y = h @ p["w_fc2"] + p["b_fc2"]
    y = _sigmoid(bn_nd(y, p["bn_fc2"], 0)).reshape(B, C, 1, 1, 1)

    s = jnp.einsum("bcdhw,c->bdhw", x, p["w_sc1"],
                   precision=jax.lax.Precision.HIGHEST)[:, None]
    s = s + p["b_sc1"].reshape(1, 1, 1, 1, 1)
    s = _elu(bn_nd(s, p["bn_sc1"], 3))
    pooled = s.reshape(B, 1, D, Hs, 8, Ws, 8).max(axis=(4, 6))
    padded = jnp.pad(pooled, ((0, 0), (0, 0), (1, 1), (1, 1), (1, 1)), mode="edge")
    c3 = lax.conv_general_dilated(padded, p["w_sc3"], (1, 1, 1), "VALID",
                                  dimension_numbers=("NCDHW", "OIDHW", "NCDHW"))
    c3 = _elu(bn_nd(c3, p["bn_sc3"], 3))
    uh = jnp.asarray(_interp_matrix(H, Hs))
    uw = jnp.asarray(_interp_matrix(W, Ws))
    up = jnp.einsum("bodij,hi,wj->bodhw", c3, uh, uw,
                    precision=jax.lax.Precision.HIGHEST)
    z = up * p["w_sc4"].reshape(1, C, 1, 1, 1) + p["b_sc4"].reshape(1, C, 1, 1, 1)
    z = _sigmoid(bn_nd(z, p["bn_sc4"], 3))
    return x * y + x * z


if __name__ == "__main__":
    B, C, D, H, W = 2, 8, 4, 16, 16          # channel=8, reduction=4
    key = jax.random.PRNGKey(0)
    kx, kp = jax.random.split(key)
    x = jax.random.normal(kx, (B, C, D, H, W), jnp.float32)
    params = init_params(kp, C, reduction=4)

    # max_chunk=512 -> 2 spatial chunks per batch element at this toy size so
    # the cross-chunk mean-accumulator path is exercised; production shapes
    # should leave max_chunk=None so the VMEM-budgeted (largest lane-dense)
    # chunk is used and grid overhead is amortized.
    fwd = jax.jit(functools.partial(se_layer_cs_forward, max_chunk=512))
    out = jax.block_until_ready(fwd(x, params))

    ref = jax.block_until_ready(reference_forward(x, params))
    assert out.shape == x.shape
    err = float(jnp.max(jnp.abs(out - ref)))
    assert err < 2e-2, f"max abs err {err}"
    print("KERNEL_OK")
</pallas_src>

<mosaic_0001>
module attributes {stable_mosaic.version = 11 : i64} {
  func.func @_head_kernel(%arg0: i32, %arg1: i32, %arg2: memref<1x8x512xf32, #tpu.memory_space<vmem>>, %arg3: memref<8x8xf32, #tpu.memory_space<vmem>>, %arg4: memref<1x1xf32, #tpu.memory_space<vmem>>, %arg5: memref<2x8xf32, #tpu.memory_space<vmem>>, %arg6: memref<2x1xf32, #tpu.memory_space<vmem>>, %arg7: memref<2x1xf32, #tpu.memory_space<vmem>>, %arg8: memref<8x2xf32, #tpu.memory_space<vmem>>, %arg9: memref<8x1xf32, #tpu.memory_space<vmem>>, %arg10: memref<8x1xf32, #tpu.memory_space<vmem>>, %arg11: memref<1x1x512xf32, #tpu.memory_space<vmem>>, %arg12: memref<1x8x1xf32, #tpu.memory_space<vmem>>, %arg13: memref<8x1xf32, #tpu.memory_space<vmem>>) attributes {dimension_semantics = [#tpu.dimension_semantics<parallel>, #tpu.dimension_semantics<arbitrary>], iteration_bounds = array<i64: 2, 2>, scalar_prefetch = 0 : i64, scratch_operands = 1 : i64, tpu.core_type = #tpu.core_type<tc>, window_params = [{transform_indices = @transform_0, window_bounds = array<i64: 1, 8, 512>}, {pipeline_mode = #tpu.pipeline_mode<synchronous>, transform_indices = @transform_1, window_bounds = array<i64: 8, 8>}, {pipeline_mode = #tpu.pipeline_mode<synchronous>, transform_indices = @transform_2, window_bounds = array<i64: 1, 1>}, {pipeline_mode = #tpu.pipeline_mode<synchronous>, transform_indices = @transform_3, window_bounds = array<i64: 2, 8>}, {pipeline_mode = #tpu.pipeline_mode<synchronous>, transform_indices = @transform_4, window_bounds = array<i64: 2, 1>}, {pipeline_mode = #tpu.pipeline_mode<synchronous>, transform_indices = @transform_5, window_bounds = array<i64: 2, 1>}, {pipeline_mode = #tpu.pipeline_mode<synchronous>, transform_indices = @transform_6, window_bounds = array<i64: 8, 2>}, {pipeline_mode = #tpu.pipeline_mode<synchronous>, transform_indices = @transform_7, window_bounds = array<i64: 8, 1>}, {pipeline_mode = #tpu.pipeline_mode<synchronous>, transform_indices = @transform_8, window_bounds = array<i64: 8, 1>}, {transform_indices = @transform_9, window_bounds = array<i64: 1, 1, 512>}, {transform_indices = @transform_10, window_bounds = array<i64: 1, 8, 1>}]} {
    %c0 = arith.constant 0 : index
    %c0_0 = arith.constant 0 : index
    %c0_1 = arith.constant 0 : index
    %0 = vector.load %arg2[%c0, %c0_0, %c0_1] : memref<1x8x512xf32, #tpu.memory_space<vmem>>, vector<1x8x512xf32>
    %1 = vector.shape_cast %0 : vector<1x8x512xf32> to vector<8x512xf32>
    %c0_i32 = arith.constant 0 : i32
    %2 = arith.cmpi eq, %arg1, %c0_i32 : i32
    %3 = arith.extui %2 : i1 to i32
    %c0_i32_2 = arith.constant 0 : i32
    %4 = arith.cmpi ne, %3, %c0_i32_2 : i32
    scf.if %4 {
      %cst_19 = arith.constant 0.000000e+00 : f32
      %30 = vector.broadcast %cst_19 : f32 to vector<8x1xf32>
      %c0_20 = arith.constant 0 : index
      %c0_21 = arith.constant 0 : index
      %31 = vector.load %arg13[%c0_20, %c0_21] : memref<8x1xf32, #tpu.memory_space<vmem>>, vector<8x1xf32>
      tpu.vector_store %arg13[%c0_20, %c0_21], %30 {strides = array<i32>} : memref<8x1xf32, #tpu.memory_space<vmem>>, vector<8x1xf32>,
    } else {
    }
    %c0_3 = arith.constant 0 : index
    %c0_4 = arith.constant 0 : index
    %5 = vector.load %arg13[%c0_3, %c0_4] : memref<8x1xf32, #tpu.memory_space<vmem>>, vector<8x1xf32>
    %cst = arith.constant dense<0.000000e+00> : vector<8xf32>
    %6 = vector.multi_reduction <add>, %1, %cst [1] : vector<8x512xf32> to vector<8xf32>
    %7 = vector.shape_cast %6 : vector<8xf32> to vector<8x1xf32>
    %8 = arith.addf %5, %7 : vector<8x1xf32>
    %c0_5 = arith.constant 0 : index
    %c0_6 = arith.constant 0 : index
    %9 = vector.load %arg13[%c0_5, %c0_6] : memref<8x1xf32, #tpu.memory_space<vmem>>, vector<8x1xf32>
    tpu.vector_store %arg13[%c0_5, %c0_6], %8 {strides = array<i32>} : memref<8x1xf32, #tpu.memory_space<vmem>>, vector<8x1xf32>,
    %c0_7 = arith.constant 0 : index
    %c0_8 = arith.constant 0 : index
    %10 = vector.load %arg3[%c0_7, %c0_8] : memref<8x8xf32, #tpu.memory_space<vmem>>, vector<8x8xf32>
    %cst_9 = arith.constant dense<0.000000e+00> : vector<8x512xf32>
    %11 = tpu.matmul %10, %1, %cst_9 {dimension_numbers = #tpu.dot_dimension_numbers<[1], [0], [0], [1], [0, 0, 1, 1], [], []>, precision = #tpu.contract_precision<fp32>} : vector<8x8xf32>, vector<8x512xf32>, vector<8x512xf32> -> vector<8x512xf32>
    %12 = vector.extract_strided_slice %11 {offsets = [0, 0], sizes = [1, 512], strides = [1, 1]} : vector<8x512xf32> to vector<1x512xf32>
    %c0_10 = arith.constant 0 : index
    %c0_11 = arith.constant 0 : index
    %13 = vector.load %arg4[%c0_10, %c0_11] : memref<1x1xf32, #tpu.memory_space<vmem>>, vector<1x1xf32>
    %14 = vector.broadcast %13 : vector<1x1xf32> to vector<1x512xf32>
    %15 = arith.addf %12, %14 : vector<1x512xf32>
    %cst_12 = arith.constant 0.000000e+00 : f32
    %16 = vector.broadcast %cst_12 : f32 to vector<1x512xf32>
    %17 = arith.cmpf ogt, %15, %16 : vector<1x512xf32>
    %cst_13 = arith.constant 0.000000e+00 : f32
    %18 = vector.broadcast %cst_13 : f32 to vector<1x512xf32>
    %19 = arith.minimumf %15, %18 : vector<1x512xf32>
    %20 = math.exp %19 : vector<1x512xf32>
    %cst_14 = arith.constant 1.000000e+00 : f32
    %21 = vector.broadcast %cst_14 : f32 to vector<1x512xf32>
    %22 = arith.subf %20, %21 : vector<1x512xf32>
    %23 = arith.select %17, %15, %22 : vector<1x512xi1>, vector<1x512xf32>
    %c0_15 = arith.constant 0 : index
    %c0_16 = arith.constant 0 : index
    %c0_17 = arith.constant 0 : index
    %24 = vector.load %arg11[%c0_15, %c0_16, %c0_17] : memref<1x1x512xf32, #tpu.memory_space<vmem>>, vector<1x1x512xf32>
    %25 = vector.shape_cast %24 : vector<1x1x512xf32> to vector<1x512xf32>
    %26 = vector.shape_cast %23 : vector<1x512xf32> to vector<1x1x512xf32>
    tpu.vector_store %arg11[%c0_15, %c0_16, %c0_17], %26 {strides = array<i32>} : memref<1x1x512xf32, #tpu.memory_space<vmem>>, vector<1x1x512xf32>,
    %c1_i32 = arith.constant 1 : i32
    %27 = arith.cmpi eq, %arg1, %c1_i32 : i32
    %28 = arith.extui %27 : i1 to i32
    %c0_i32_18 = arith.constant 0 : i32
    %29 = arith.cmpi ne, %28, %c0_i32_18 : i32
    scf.if %29 {
      %c0_19 = arith.constant 0 : index
      %c0_20 = arith.constant 0 : index
      %30 = vector.load %arg13[%c0_19, %c0_20] : memref<8x1xf32, #tpu.memory_space<vmem>>, vector<8x1xf32>
      %cst_21 = arith.constant 9.765625E-4 : f32
      %31 = vector.broadcast %cst_21 : f32 to vector<8x1xf32>
      %32 = arith.mulf %30, %31 : vector<8x1xf32>
      %33 = vector.shape_cast %32 : vector<8x1xf32> to vector<8x1xf32>
      %34 = vector.broadcast %33 : vector<8x1xf32> to vector<8x128xf32>
      %c0_22 = arith.constant 0 : index
      %c0_23 = arith.constant 0 : index
      %35 = vector.load %arg5[%c0_22, %c0_23] : memref<2x8xf32, #tpu.memory_space<vmem>>, vector<2x8xf32>
      %cst_24 = arith.constant dense<0.000000e+00> : vector<2x128xf32>
      %36 = tpu.matmul %35, %34, %cst_24 {dimension_numbers = #tpu.dot_dimension_numbers<[1], [0], [0], [1], [0, 0, 1, 1], [], []>, precision = #tpu.contract_precision<fp32>} : vector<2x8xf32>, vector<8x128xf32>, vector<2x128xf32> -> vector<2x128xf32>
      %c0_25 = arith.constant 0 : index
      %c0_26 = arith.constant 0 : index
      %37 = vector.load %arg6[%c0_25, %c0_26] : memref<2x1xf32, #tpu.memory_space<vmem>>, vector<2x1xf32>
      %38 = vector.broadcast %37 : vector<2x1xf32> to vector<2x128xf32>
      %39 = arith.mulf %36, %38 : vector<2x128xf32>
      %c0_27 = arith.constant 0 : index
      %c0_28 = arith.constant 0 : index
      %40 = vector.load %arg7[%c0_27, %c0_28] : memref<2x1xf32, #tpu.memory_space<vmem>>, vector<2x1xf32>
      %41 = vector.broadcast %40 : vector<2x1xf32> to vector<2x128xf32>
      %42 = arith.addf %39, %41 : vector<2x128xf32>
      %cst_29 = arith.constant 0.000000e+00 : f32
      %43 = vector.broadcast %cst_29 : f32 to vector<2x128xf32>
      %44 = arith.cmpf ogt, %42, %43 : vector<2x128xf32>
      %cst_30 = arith.constant 0.000000e+00 : f32
      %45 = vector.broadcast %cst_30 : f32 to vector<2x128xf32>
      %46 = arith.minimumf %42, %45 : vector<2x128xf32>
      %47 = math.exp %46 : vector<2x128xf32>
      %cst_31 = arith.constant 1.000000e+00 : f32
      %48 = vector.broadcast %cst_31 : f32 to vector<2x128xf32>
      %49 = arith.subf %47, %48 : vector<2x128xf32>
      %50 = arith.select %44, %42, %49 : vector<2x128xi1>, vector<2x128xf32>
      %c0_32 = arith.constant 0 : index
      %c0_33 = arith.constant 0 : index
      %51 = vector.load %arg8[%c0_32, %c0_33] : memref<8x2xf32, #tpu.memory_space<vmem>>, vector<8x2xf32>
      %cst_34 = arith.constant dense<0.000000e+00> : vector<8x128xf32>
      %52 = tpu.matmul %51, %50, %cst_34 {dimension_numbers = #tpu.dot_dimension_numbers<[1], [0], [0], [1], [0, 0, 1, 1], [], []>, precision = #tpu.contract_precision<fp32>} : vector<8x2xf32>, vector<2x128xf32>, vector<8x128xf32> -> vector<8x128xf32>
      %c0_35 = arith.constant 0 : index
      %c0_36 = arith.constant 0 : index
      %53 = vector.load %arg9[%c0_35, %c0_36] : memref<8x1xf32, #tpu.memory_space<vmem>>, vector<8x1xf32>
      %54 = vector.broadcast %53 : vector<8x1xf32> to vector<8x128xf32>
      %55 = arith.mulf %52, %54 : vector<8x128xf32>
      %c0_37 = arith.constant 0 : index
      %c0_38 = arith.constant 0 : index
      %56 = vector.load %arg10[%c0_37, %c0_38] : memref<8x1xf32, #tpu.memory_space<vmem>>, vector<8x1xf32>
      %57 = vector.broadcast %56 : vector<8x1xf32> to vector<8x128xf32>
      %58 = arith.addf %55, %57 : vector<8x128xf32>
      %cst_39 = arith.constant 0.000000e+00 : f32
      %59 = vector.broadcast %cst_39 : f32 to vector<8x128xf32>
      %60 = arith.subf %59, %58 : vector<8x128xf32>
      %61 = math.exp %60 : vector<8x128xf32>
      %cst_40 = arith.constant 1.000000e+00 : f32
      %62 = vector.broadcast %cst_40 : f32 to vector<8x128xf32>
      %63 = arith.addf %62, %61 : vector<8x128xf32>
      %cst_41 = arith.constant 1.000000e+00 : f32
      %64 = vector.broadcast %cst_41 : f32 to vector<8x128xf32>
      %65 = arith.divf %64, %63 : vector<8x128xf32>
      %66 = vector.extract_strided_slice %65 {offsets = [0, 0], sizes = [8, 1], strides = [1, 1]} : vector<8x128xf32> to vector<8x1xf32>
      %c0_42 = arith.constant 0 : index
      %c0_43 = arith.constant 0 : index
      %c0_44 = arith.constant 0 : index
      %67 = vector.load %arg12[%c0_42, %c0_43, %c0_44] : memref<1x8x1xf32, #tpu.memory_space<vmem>>, vector<1x8x1xf32>
      %68 = vector.shape_cast %67 : vector<1x8x1xf32> to vector<8x1xf32>
      %69 = vector.shape_cast %66 : vector<8x1xf32> to vector<1x8x1xf32>
      tpu.vector_store %arg12[%c0_42, %c0_43, %c0_44], %69 {strides = array<i32>} : memref<1x8x1xf32, #tpu.memory_space<vmem>>, vector<1x8x1xf32>,
    } else {
    }
    return
  }
  func.func @transform_0(%arg0: i32, %arg1: i32) -> (i32, i32, i32) {
    %c0_i32 = arith.constant 0 : i32
    %c0_i32_0 = arith.constant 0 : i32
    return %arg0, %c0_i32, %arg1 : i32, i32, i32
  }
  func.func @transform_1(%arg0: i32, %arg1: i32) -> (i32, i32) {
    %c0_i32 = arith.constant 0 : i32
    %c0_i32_0 = arith.constant 0 : i32
    %c0_i32_1 = arith.constant 0 : i32
    return %c0_i32, %c0_i32_0 : i32, i32
  }
  func.func @transform_2(%arg0: i32, %arg1: i32) -> (i32, i32) {
    %c0_i32 = arith.constant 0 : i32
    %c0_i32_0 = arith.constant 0 : i32
    %c0_i32_1 = arith.constant 0 : i32
    return %c0_i32, %c0_i32_0 : i32, i32
  }
  func.func @transform_3(%arg0: i32, %arg1: i32) -> (i32, i32) {
    %c0_i32 = arith.constant 0 : i32
    %c0_i32_0 = arith.constant 0 : i32
    %c0_i32_1 = arith.constant 0 : i32
    return %c0_i32, %c0_i32_0 : i32, i32
  }
  func.func @transform_4(%arg0: i32, %arg1: i32) -> (i32, i32) {
    %c0_i32 = arith.constant 0 : i32
    %c0_i32_0 = arith.constant 0 : i32
    %c0_i32_1 = arith.constant 0 : i32
    return %c0_i32, %c0_i32_0 : i32, i32
  }
  func.func @transform_5(%arg0: i32, %arg1: i32) -> (i32, i32) {
    %c0_i32 = arith.constant 0 : i32
    %c0_i32_0 = arith.constant 0 : i32
    %c0_i32_1 = arith.constant 0 : i32
    return %c0_i32, %c0_i32_0 : i32, i32
  }
  func.func @transform_6(%arg0: i32, %arg1: i32) -> (i32, i32) {
    %c0_i32 = arith.constant 0 : i32
    %c0_i32_0 = arith.constant 0 : i32
    %c0_i32_1 = arith.constant 0 : i32
    return %c0_i32, %c0_i32_0 : i32, i32
  }
  func.func @transform_7(%arg0: i32, %arg1: i32) -> (i32, i32) {
    %c0_i32 = arith.constant 0 : i32
    %c0_i32_0 = arith.constant 0 : i32
    %c0_i32_1 = arith.constant 0 : i32
    return %c0_i32, %c0_i32_0 : i32, i32
  }
  func.func @transform_8(%arg0: i32, %arg1: i32) -> (i32, i32) {
    %c0_i32 = arith.constant 0 : i32
    %c0_i32_0 = arith.constant 0 : i32
    %c0_i32_1 = arith.constant 0 : i32
    return %c0_i32, %c0_i32_0 : i32, i32
  }
  func.func @transform_9(%arg0: i32, %arg1: i32) -> (i32, i32, i32) {
    %c0_i32 = arith.constant 0 : i32
    %c0_i32_0 = arith.constant 0 : i32
    return %arg0, %c0_i32, %arg1 : i32, i32, i32
  }
  func.func @transform_10(%arg0: i32, %arg1: i32) -> (i32, i32, i32) {
    %c0_i32 = arith.constant 0 : i32
    %c0_i32_0 = arith.constant 0 : i32
    %c0_i32_1 = arith.constant 0 : i32
    return %arg0, %c0_i32, %c0_i32_0 : i32, i32, i32
  }
}

module attributes {stable_mosaic.version = 11 : i64} {
  func.func @_fuse_kernel(%arg0: i32, %arg1: i32, %arg2: memref<1x8x512xf32, #tpu.memory_space<vmem>>, %arg3: memref<1x8x1xf32, #tpu.memory_space<vmem>>, %arg4: memref<1x1x512xf32, #tpu.memory_space<vmem>>, %arg5: memref<8x1xf32, #tpu.memory_space<vmem>>, %arg6: memref<8x1xf32, #tpu.memory_space<vmem>>, %arg7: memref<1x8x512xf32, #tpu.memory_space<vmem>>) attributes {dimension_semantics = [#tpu.dimension_semantics<parallel>, #tpu.dimension_semantics<parallel>], iteration_bounds = array<i64: 2, 2>, scalar_prefetch = 0 : i64, scratch_operands = 0 : i64, tpu.core_type = #tpu.core_type<tc>, window_params = [{transform_indices = @transform_0, window_bounds = array<i64: 1, 8, 512>}, {transform_indices = @transform_1, window_bounds = array<i64: 1, 8, 1>}, {transform_indices = @transform_2, window_bounds = array<i64: 1, 1, 512>}, {pipeline_mode = #tpu.pipeline_mode<synchronous>, transform_indices = @transform_3, window_bounds = array<i64: 8, 1>}, {pipeline_mode = #tpu.pipeline_mode<synchronous>, transform_indices = @transform_4, window_bounds = array<i64: 8, 1>}, {transform_indices = @transform_5, window_bounds = array<i64: 1, 8, 512>}]} {
    %c0 = arith.constant 0 : index
    %c0_0 = arith.constant 0 : index
    %c0_1 = arith.constant 0 : index
    %0 = vector.load %arg2[%c0, %c0_0, %c0_1] : memref<1x8x512xf32, #tpu.memory_space<vmem>>, vector<1x8x512xf32>
    %1 = vector.shape_cast %0 : vector<1x8x512xf32> to vector<8x512xf32>
    %c0_2 = arith.constant 0 : index
    %c0_3 = arith.constant 0 : index
    %c0_4 = arith.constant 0 : index
    %2 = vector.load %arg3[%c0_2, %c0_3, %c0_4] : memref<1x8x1xf32, #tpu.memory_space<vmem>>, vector<1x8x1xf32>
    %3 = vector.shape_cast %2 : vector<1x8x1xf32> to vector<8x1xf32>
    %c0_5 = arith.constant 0 : index
    %c0_6 = arith.constant 0 : index
    %c0_7 = arith.constant 0 : index
    %4 = vector.load %arg4[%c0_5, %c0_6, %c0_7] : memref<1x1x512xf32, #tpu.memory_space<vmem>>, vector<1x1x512xf32>
    %5 = vector.shape_cast %4 : vector<1x1x512xf32> to vector<1x512xf32>
    %c0_8 = arith.constant 0 : index
    %c0_9 = arith.constant 0 : index
    %6 = vector.load %arg5[%c0_8, %c0_9] : memref<8x1xf32, #tpu.memory_space<vmem>>, vector<8x1xf32>
    %7 = vector.broadcast %6 : vector<8x1xf32> to vector<8x512xf32>
    %8 = vector.broadcast %5 : vector<1x512xf32> to vector<8x512xf32>
    %9 = arith.mulf %7, %8 : vector<8x512xf32>
    %c0_10 = arith.constant 0 : index
    %c0_11 = arith.constant 0 : index
    %10 = vector.load %arg6[%c0_10, %c0_11] : memref<8x1xf32, #tpu.memory_space<vmem>>, vector<8x1xf32>
    %11 = vector.broadcast %10 : vector<8x1xf32> to vector<8x512xf32>
    %12 = arith.addf %9, %11 : vector<8x512xf32>
    %cst = arith.constant 0.000000e+00 : f32
    %13 = vector.broadcast %cst : f32 to vector<8x512xf32>
    %14 = arith.subf %13, %12 : vector<8x512xf32>
    %15 = math.exp %14 : vector<8x512xf32>
    %cst_12 = arith.constant 1.000000e+00 : f32
    %16 = vector.broadcast %cst_12 : f32 to vector<8x512xf32>
    %17 = arith.addf %16, %15 : vector<8x512xf32>
    %18 = tpu.reciprocal %17 {approx = true} : vector<8x512xf32> -> vector<8x512xf32>
    %19 = vector.broadcast %3 : vector<8x1xf32> to vector<8x512xf32>
    %20 = arith.addf %19, %18 : vector<8x512xf32>
    %21 = arith.mulf %1, %20 : vector<8x512xf32>
    %c0_13 = arith.constant 0 : index
    %c0_14 = arith.constant 0 : index
    %c0_15 = arith.constant 0 : index
    %22 = vector.load %arg7[%c0_13, %c0_14, %c0_15] : memref<1x8x512xf32, #tpu.memory_space<vmem>>, vector<1x8x512xf32>
    %23 = vector.shape_cast %22 : vector<1x8x512xf32> to vector<8x512xf32>
    %24 = vector.shape_cast %21 : vector<8x512xf32> to vector<1x8x512xf32>
    tpu.vector_store %arg7[%c0_13, %c0_14, %c0_15], %24 {strides = array<i32>} : memref<1x8x512xf32, #tpu.memory_space<vmem>>, vector<1x8x512xf32>,
    return
  }
  func.func @transform_0(%arg0: i32, %arg1: i32) -> (i32, i32, i32) {
    %c0_i32 = arith.constant 0 : i32
    %c0_i32_0 = arith.constant 0 : i32
    return %arg0, %c0_i32, %arg1 : i32, i32, i32
  }
  func.func @transform_1(%arg0: i32, %arg1: i32) -> (i32, i32, i32) {
    %c0_i32 = arith.constant 0 : i32
    %c0_i32_0 = arith.constant 0 : i32
    %c0_i32_1 = arith.constant 0 : i32
    return %arg0, %c0_i32, %c0_i32_0 : i32, i32, i32
  }
  func.func @transform_2(%arg0: i32, %arg1: i32) -> (i32, i32, i32) {
    %c0_i32 = arith.constant 0 : i32
    %c0_i32_0 = arith.constant 0 : i32
    return %arg0, %c0_i32, %arg1 : i32, i32, i32
  }
  func.func @transform_3(%arg0: i32, %arg1: i32) -> (i32, i32) {
    %c0_i32 = arith.constant 0 : i32
    %c0_i32_0 = arith.constant 0 : i32
    %c0_i32_1 = arith.constant 0 : i32
    return %c0_i32, %c0_i32_0 : i32, i32
  }
  func.func @transform_4(%arg0: i32, %arg1: i32) -> (i32, i32) {
    %c0_i32 = arith.constant 0 : i32
    %c0_i32_0 = arith.constant 0 : i32
    %c0_i32_1 = arith.constant 0 : i32
    return %c0_i32, %c0_i32_0 : i32, i32
  }
  func.func @transform_5(%arg0: i32, %arg1: i32) -> (i32, i32, i32) {
    %c0_i32 = arith.constant 0 : i32
    %c0_i32_0 = arith.constant 0 : i32
    return %arg0, %c0_i32, %arg1 : i32, i32, i32
  }
}

</mosaic_0001>

<llo_original>
// kernel: se_layer_cs_forward.2
$region0: #{se_layer_cs_forward.2}
  #allocation0 [shape = 'u32[]', space=smem, size = 0x4, offset = 0x4, fixed_abs, tag = 'smem constant byte address 0x4 - core index']
  #allocation1 [shape = 'u32[72,128]{1,0:T(1,128)}', space=vmem, size = 0x9000, scoped, tag = 'internal scratch']
  #allocation2 [shape = 'f32[8,1]{1,0:T(8,128)}', space=vmem, size = 0x1000, scoped, tag = 'scratch operand']
  #allocation3 [shape = 'f32[1,1]{1,0:T(1,128)S(1)}', space=vmem, size = 0x200, scoped, tag = 'scoped memory for se_layer_cs_forward.2']
  %s0 = inlined_call_operand.vmem [shape: f32[2,8,1024], index: 0, kind: input, shape index: {}]
  %s1 = inlined_call_operand.vmem [shape: f32[8,8], index: 1, kind: input, shape index: {}]
  %s2 = inlined_call_operand.<no memory space> [shape: f32[1,1], index: 2, kind: input, shape index: {}]
  %s3 = inlined_call_operand.vmem [shape: f32[2,8], index: 3, kind: input, shape index: {}]
  %s4 = inlined_call_operand.vmem [shape: f32[2,1], index: 4, kind: input, shape index: {}]
  %s5 = inlined_call_operand.vmem [shape: f32[2,1], index: 5, kind: input, shape index: {}]
  %s6 = inlined_call_operand.vmem [shape: f32[8,2], index: 6, kind: input, shape index: {}]
  %s7 = inlined_call_operand.vmem [shape: f32[8,1], index: 7, kind: input, shape index: {}]
  %s8 = inlined_call_operand.vmem [shape: f32[8,1], index: 8, kind: input, shape index: {}]
  %s9 = inlined_call_operand.vmem [shape: f32[2,1,1024], index: 9, kind: output, shape index: {0}]
  %s10 = inlined_call_operand.vmem [shape: f32[2,8,1], index: 10, kind: output, shape index: {1}]
  %11 = xla_tuple %s9, %s10
  %s12 = sld [smem:[#allocation0]]
  $region85: #{se_layer_cs_forward.2} parent=0
    _
  %s14 = ssub.s32 1, %s12
  %s15 = scalar_select 0, %s14, %s12
  %v16 = vstv %s2
  %17 = vst [vmem:[#allocation3] sm:$0x1] %v16
  loop: start=0, step=1, limit=6
  $region2: #{se_layer_cs_forward.2} parent=0 // loop_pre_header
    _
  $region3: #{se_layer_cs_forward.2} parent=0 // loop_header
    %s19 = sphi 0, %s23
    %p20 = scmp.ge.s32.totalorder %s19, 6
    %s26 = sphi 0, %s38
    %s27 = sphi 0, %s34
    %s28 = sphi 0, %s26
    %s29 = sphi 0, %s27
    %s30 = sphi 0, %s28
    %s31 = sphi 0, %s29
    %s43 = sphi 0, %s45
    %s46 = sphi 0, %s43
    %s47 = sphi 0, %s46
    %s63 = sphi 0, %s47
    %s67 = sphi 0, %s67
    %s69 = sphi 0, %s67
    %s70 = sphi 0, %s69
    %s84 = sphi 0, %s70
    %s88 = sphi 0, %s88
    %s90 = sphi 0, %s88
    %s91 = sphi 0, %s90
    %s105 = sphi 0, %s91
    %s109 = sphi 0, %s109
    %s111 = sphi 0, %s109
    %s112 = sphi 0, %s111
    %s126 = sphi 0, %s112
    %s130 = sphi 0, %s130
    %s132 = sphi 0, %s130
    %s133 = sphi 0, %s132
    %s147 = sphi 0, %s133
    %s151 = sphi 0, %s151
    %s153 = sphi 0, %s151
    %s154 = sphi 0, %s153
    %s168 = sphi 0, %s154
    %s172 = sphi 0, %s172
    %s174 = sphi 0, %s172
    %s175 = sphi 0, %s174
    %s189 = sphi 0, %s175
    %s193 = sphi 0, %s193
    %s195 = sphi 0, %s193
    %s196 = sphi 0, %s195
    %s210 = sphi 0, %s196
    %s214 = sphi 0, %s214
    %s216 = sphi 0, %s214
    %s217 = sphi 0, %s216
    %s231 = sphi 0, %s217
    %s239 = sphi 0, %s241
    %s242 = sphi 0, %s239
    %s243 = sphi 0, %s242
    %s259 = sphi 0, %s243
    %s265 = sphi 0, %s267
    %s268 = sphi 0, %s265
    %s269 = sphi 0, %s268
    %s285 = sphi 0, %s269
  $region4: #{se_layer_cs_forward.2} parent=0 // loop_header_branch
    %22 = sbr.rel (%p20) target = $region8
  $region5: #{se_layer_cs_forward.2} parent=0 // loop_body
    %s24 = ssub.s32 %s19, 1
    %s25 = ssub.s32 %s19, 2
    %s32 = sadd.s32 1, %s27
    %p33 = scmp.ge.s32.totalorder %s32, 2
    %s34 = scalar_select %p33, 0, %s32
    %s35 = sadd.s32 1, %s26
    %s36 = scalar_select %p33, %s35, %s26
    %p37 = scmp.ge.s32.totalorder %s36, 2
    %s38 = scalar_select %p37, 0, %s36
    %s39 = ssub.s32 %s26, %s38
    %s40 = ssub.s32 %s27, %s34
    %s41 = sor.u32 %s39, %s40
    %p42 = scmp.eq.s32.totalorder %s41, 0
    %s44 = sadd.s32 %s43, 1
    %s45 = scalar_select %p42, %s43, %s44
    %p48 = pneg %p42
    %p49 = scmp.eq.s32.totalorder %s19, 3
    %p50 = por %p48, %p49
    %p51 = scmp.ne.s32.totalorder %s43, %s46
    %p52 = scmp.eq.s32.totalorder %s19, 0
    %p53 = por %p51, %p52
    %p54 = scmp.ne.s32.totalorder %s43, %s46
    %p55 = scmp.eq.s32.totalorder %s24, 3
    %p56 = por %p54, %p55
    %p57 = scmp.ne.s32.totalorder %s46, %s47
    %p58 = scmp.eq.s32.totalorder %s24, 0
    %p59 = por %p57, %p58
    %p60 = scmp.ne.s32.totalorder %s46, %s47
    %p61 = scmp.eq.s32.totalorder %s25, 3
    %p62 = por %p60, %p61
    %p64 = scmp.ne.s32.totalorder %s47, %s63
    %p65 = scmp.eq.s32.totalorder %s25, 0
    %p66 = por %p64, %p65
    %s68 = sadd.s32 %s67, 1
    %p71 = scmp.eq.s32.totalorder %s19, 3
    %p72 = scmp.ne.s32.totalorder %s67, %s69
    %p73 = scmp.eq.s32.totalorder %s19, 0
    %p74 = por %p72, %p73
    %p75 = scmp.ne.s32.totalorder %s67, %s69
    %p76 = scmp.eq.s32.totalorder %s24, 3
    %p77 = por %p75, %p76
    %p78 = scmp.ne.s32.totalorder %s69, %s70
    %p79 = scmp.eq.s32.totalorder %s24, 0
    %p80 = por %p78, %p79
    %p81 = scmp.ne.s32.totalorder %s69, %s70
    %p82 = scmp.eq.s32.totalorder %s25, 3
    %p83 = por %p81, %p82
    %p85 = scmp.ne.s32.totalorder %s70, %s84
    %p86 = scmp.eq.s32.totalorder %s25, 0
    %p87 = por %p85, %p86
    %s89 = sadd.s32 %s88, 1
    %p92 = scmp.eq.s32.totalorder %s19, 3
    %p93 = scmp.ne.s32.totalorder %s88, %s90
    %p94 = scmp.eq.s32.totalorder %s19, 0
    %p95 = por %p93, %p94
    %p96 = scmp.ne.s32.totalorder %s88, %s90
    %p97 = scmp.eq.s32.totalorder %s24, 3
    %p98 = por %p96, %p97
    %p99 = scmp.ne.s32.totalorder %s90, %s91
    %p100 = scmp.eq.s32.totalorder %s24, 0
    %p101 = por %p99, %p100
    %p102 = scmp.ne.s32.totalorder %s90, %s91
    %p103 = scmp.eq.s32.totalorder %s25, 3
    %p104 = por %p102, %p103
    %p106 = scmp.ne.s32.totalorder %s91, %s105
    %p107 = scmp.eq.s32.totalorder %s25, 0
    %p108 = por %p106, %p107
    %s110 = sadd.s32 %s109, 1
    %p113 = scmp.eq.s32.totalorder %s19, 3
    %p114 = scmp.ne.s32.totalorder %s109, %s111
    %p115 = scmp.eq.s32.totalorder %s19, 0
    %p116 = por %p114, %p115
    %p117 = scmp.ne.s32.totalorder %s109, %s111
    %p118 = scmp.eq.s32.totalorder %s24, 3
    %p119 = por %p117, %p118
    %p120 = scmp.ne.s32.totalorder %s111, %s112
    %p121 = scmp.eq.s32.totalorder %s24, 0
    %p122 = por %p120, %p121
    %p123 = scmp.ne.s32.totalorder %s111, %s112
    %p124 = scmp.eq.s32.totalorder %s25, 3
    %p125 = por %p123, %p124
    %p127 = scmp.ne.s32.totalorder %s112, %s126
    %p128 = scmp.eq.s32.totalorder %s25, 0
    %p129 = por %p127, %p128
    %s131 = sadd.s32 %s130, 1
    %p134 = scmp.eq.s32.totalorder %s19, 3
    %p135 = scmp.ne.s32.totalorder %s130, %s132
    %p136 = scmp.eq.s32.totalorder %s19, 0
    %p137 = por %p135, %p136
    %p138 = scmp.ne.s32.totalorder %s130, %s132
    %p139 = scmp.eq.s32.totalorder %s24, 3
    %p140 = por %p138, %p139
    %p141 = scmp.ne.s32.totalorder %s132, %s133
    %p142 = scmp.eq.s32.totalorder %s24, 0
    %p143 = por %p141, %p142
    %p144 = scmp.ne.s32.totalorder %s132, %s133
    %p145 = scmp.eq.s32.totalorder %s25, 3
    %p146 = por %p144, %p145
    %p148 = scmp.ne.s32.totalorder %s133, %s147
    %p149 = scmp.eq.s32.totalorder %s25, 0
    %p150 = por %p148, %p149
    %s152 = sadd.s32 %s151, 1
    %p155 = scmp.eq.s32.totalorder %s19, 3
    %p156 = scmp.ne.s32.totalorder %s151, %s153
    %p157 = scmp.eq.s32.totalorder %s19, 0
    %p158 = por %p156, %p157
    %p159 = scmp.ne.s32.totalorder %s151, %s153
    %p160 = scmp.eq.s32.totalorder %s24, 3
    %p161 = por %p159, %p160
    %p162 = scmp.ne.s32.totalorder %s153, %s154
    %p163 = scmp.eq.s32.totalorder %s24, 0
    %p164 = por %p162, %p163
    %p165 = scmp.ne.s32.totalorder %s153, %s154
    %p166 = scmp.eq.s32.totalorder %s25, 3
    %p167 = por %p165, %p166
    %p169 = scmp.ne.s32.totalorder %s154, %s168
    %p170 = scmp.eq.s32.totalorder %s25, 0
    %p171 = por %p169, %p170
    %s173 = sadd.s32 %s172, 1
    %p176 = scmp.eq.s32.totalorder %s19, 3
    %p177 = scmp.ne.s32.totalorder %s172, %s174
    %p178 = scmp.eq.s32.totalorder %s19, 0
    %p179 = por %p177, %p178
    %p180 = scmp.ne.s32.totalorder %s172, %s174
    %p181 = scmp.eq.s32.totalorder %s24, 3
    %p182 = por %p180, %p181
    %p183 = scmp.ne.s32.totalorder %s174, %s175
    %p184 = scmp.eq.s32.totalorder %s24, 0
    %p185 = por %p183, %p184
    %p186 = scmp.ne.s32.totalorder %s174, %s175
    %p187 = scmp.eq.s32.totalorder %s25, 3
    %p188 = por %p186, %p187
    %p190 = scmp.ne.s32.totalorder %s175, %s189
    %p191 = scmp.eq.s32.totalorder %s25, 0
    %p192 = por %p190, %p191
    %s194 = sadd.s32 %s193, 1
    %p197 = scmp.eq.s32.totalorder %s19, 3
    %p198 = scmp.ne.s32.totalorder %s193, %s195
    %p199 = scmp.eq.s32.totalorder %s19, 0
    %p200 = por %p198, %p199
    %p201 = scmp.ne.s32.totalorder %s193, %s195
    %p202 = scmp.eq.s32.totalorder %s24, 3
    %p203 = por %p201, %p202
    %p204 = scmp.ne.s32.totalorder %s195, %s196
    %p205 = scmp.eq.s32.totalorder %s24, 0
    %p206 = por %p204, %p205
    %p207 = scmp.ne.s32.totalorder %s195, %s196
    %p208 = scmp.eq.s32.totalorder %s25, 3
    %p209 = por %p207, %p208
    %p211 = scmp.ne.s32.totalorder %s196, %s210
    %p212 = scmp.eq.s32.totalorder %s25, 0
    %p213 = por %p211, %p212
    %s215 = sadd.s32 %s214, 1
    %p218 = scmp.eq.s32.totalorder %s19, 3
    %p219 = scmp.ne.s32.totalorder %s214, %s216
    %p220 = scmp.eq.s32.totalorder %s19, 0
    %p221 = por %p219, %p220
    %p222 = scmp.ne.s32.totalorder %s214, %s216
    %p223 = scmp.eq.s32.totalorder %s24, 3
    %p224 = por %p222, %p223
    %p225 = scmp.ne.s32.totalorder %s216, %s217
    %p226 = scmp.eq.s32.totalorder %s24, 0
    %p227 = por %p225, %p226
    %p228 = scmp.ne.s32.totalorder %s216, %s217
    %p229 = scmp.eq.s32.totalorder %s25, 3
    %p230 = por %p228, %p229
    %p232 = scmp.ne.s32.totalorder %s217, %s231
    %p233 = scmp.eq.s32.totalorder %s25, 0
    %p234 = por %p232, %p233
    %s235 = ssub.s32 %s26, %s38
    %s236 = ssub.s32 %s27, %s34
    %s237 = sor.u32 %s235, %s236
    %p238 = scmp.eq.s32.totalorder %s237, 0
    %s240 = sadd.s32 %s239, 1
    %s241 = scalar_select %p238, %s239, %s240
    %p244 = pneg %p238
    %p245 = scmp.eq.s32.totalorder %s19, 3
    %p246 = por %p244, %p245
    %p247 = scmp.ne.s32.totalorder %s239, %s242
    %p248 = scmp.eq.s32.totalorder %s19, 0
    %p249 = por %p247, %p248
    %p250 = scmp.ne.s32.totalorder %s239, %s242
    %p251 = scmp.eq.s32.totalorder %s24, 3
    %p252 = por %p250, %p251
    %p253 = scmp.ne.s32.totalorder %s242, %s243
    %p254 = scmp.eq.s32.totalorder %s24, 0
    %p255 = por %p253, %p254
    %p256 = scmp.ne.s32.totalorder %s242, %s243
    %p257 = scmp.eq.s32.totalorder %s25, 3
    %p258 = por %p256, %p257
    %p260 = scmp.ne.s32.totalorder %s243, %s259
    %p261 = scmp.eq.s32.totalorder %s25, 0
    %p262 = por %p260, %p261
    %s263 = ssub.s32 %s26, %s38
    %p264 = scmp.eq.s32.totalorder %s263, 0
    %s266 = sadd.s32 %s265, 1
    %s267 = scalar_select %p264, %s265, %s266
    %p270 = pneg %p264
    %p271 = scmp.eq.s32.totalorder %s19, 3
    %p272 = por %p270, %p271
    %p273 = scmp.ne.s32.totalorder %s265, %s268
    %p274 = scmp.eq.s32.totalorder %s19, 0
    %p275 = por %p273, %p274
    %p276 = scmp.ne.s32.totalorder %s265, %s268
    %p277 = scmp.eq.s32.totalorder %s24, 3
    %p278 = por %p276, %p277
    %p279 = scmp.ne.s32.totalorder %s268, %s269
    %p280 = scmp.eq.s32.totalorder %s24, 0
    %p281 = por %p279, %p280
    %p282 = scmp.ne.s32.totalorder %s268, %s269
    %p283 = scmp.eq.s32.totalorder %s25, 3
    %p284 = por %p282, %p283
    %p286 = scmp.ne.s32.totalorder %s269, %s285
    %p287 = scmp.eq.s32.totalorder %s25, 0
    %p288 = por %p286, %p287
    %p289 = scmp.le.s32.totalorder 1, %s19
    %p290 = scmp.lt.s32.totalorder %s19, 5
    %p291 = pnand %p289, %p290
    %p292 = pneg %p291
    // Predicated region
    $region9: #{se_layer_cs_forward.2} parent=5 // pred_check
      _
    $region10: #{se_layer_cs_forward.2} parent=5 // pred_check_branch
      %294 = sbr.rel (%p291) target = $region12
    $region11: #{se_layer_cs_forward.2} parent=5 // pred_region
      %s295 = ssub.s32 %s19, 1
      // Predicated region
      $region13: #{se_layer_cs_forward.2} parent=11 // pred_check
        %p296 = pneg %p80
      $region14: #{se_layer_cs_forward.2} parent=11 // pred_check_branch
        %298 = sbr.rel (%p296) target = $region16
      $region15: #{se_layer_cs_forward.2} parent=11 // pred_region
        _
      $region16: #{se_layer_cs_forward.2} parent=11 // pred_fallthru
        _
      // Predicated region
      $region17: #{se_layer_cs_forward.2} parent=11 // pred_check
        %p299 = pneg %p101
      $region18: #{se_layer_cs_forward.2} parent=11 // pred_check_branch
        %301 = sbr.rel (%p299) target = $region20
      $region19: #{se_layer_cs_forward.2} parent=11 // pred_region
        _
      $region20: #{se_layer_cs_forward.2} parent=11 // pred_fallthru
        _
      // Predicated region
      $region21: #{se_layer_cs_forward.2} parent=11 // pred_check
        %p302 = pneg %p122
      $region22: #{se_layer_cs_forward.2} parent=11 // pred_check_branch
        %304 = sbr.rel (%p302) target = $region24
      $region23: #{se_layer_cs_forward.2} parent=11 // pred_region
        _
      $region24: #{se_layer_cs_forward.2} parent=11 // pred_fallthru
        _
      // Predicated region
      $region25: #{se_layer_cs_forward.2} parent=11 // pred_check
        %p305 = pneg %p143
      $region26: #{se_layer_cs_forward.2} parent=11 // pred_check_branch
        %307 = sbr.rel (%p305) target = $region28
      $region27: #{se_layer_cs_forward.2} parent=11 // pred_region
        _
      $region28: #{se_layer_cs_forward.2} parent=11 // pred_fallthru
        _
      // Predicated region
      $region29: #{se_layer_cs_forward.2} parent=11 // pred_check
        %p308 = pneg %p164
      $region30: #{se_layer_cs_forward.2} parent=11 // pred_check_branch
        %310 = sbr.rel (%p308) target = $region32
      $region31: #{se_layer_cs_forward.2} parent=11 // pred_region
        _
      $region32: #{se_layer_cs_forward.2} parent=11 // pred_fallthru
        _
      // Predicated region
      $region33: #{se_layer_cs_forward.2} parent=11 // pred_check
        %p311 = pneg %p185
      $region34: #{se_layer_cs_forward.2} parent=11 // pred_check_branch
        %313 = sbr.rel (%p311) target = $region36
      $region35: #{se_layer_cs_forward.2} parent=11 // pred_region
        _
      $region36: #{se_layer_cs_forward.2} parent=11 // pred_fallthru
        _
      // Predicated region
      $region37: #{se_layer_cs_forward.2} parent=11 // pred_check
        %p314 = pneg %p206
      $region38: #{se_layer_cs_forward.2} parent=11 // pred_check_branch
        %316 = sbr.rel (%p314) target = $region40
      $region39: #{se_layer_cs_forward.2} parent=11 // pred_region
        _
      $region40: #{se_layer_cs_forward.2} parent=11 // pred_fallthru
        _
      // Predicated region
      $region41: #{se_layer_cs_forward.2} parent=11 // pred_check
        %p317 = pneg %p227
      $region42: #{se_layer_cs_forward.2} parent=11 // pred_check_branch
        %319 = sbr.rel (%p317) target = $region44
      $region43: #{se_layer_cs_forward.2} parent=11 // pred_region
        _
      $region44: #{se_layer_cs_forward.2} parent=11 // pred_fallthru
        _
    $region12: #{se_layer_cs_forward.2} parent=5 // pred_fallthru
      _
    %p320 = scmp.lt.s32.totalorder %s19, 4
    // Predicated region
    $region45: #{se_layer_cs_forward.2} parent=5 // pred_check
      %p321 = pneg %p320
    $region46: #{se_layer_cs_forward.2} parent=5 // pred_check_branch
      %323 = sbr.rel (%p321) target = $region48
    $region47: #{se_layer_cs_forward.2} parent=5 // pred_region
      // Predicated region
      $region49: #{se_layer_cs_forward.2} parent=47 // pred_check
        %p324 = pneg %p53
      $region50: #{se_layer_cs_forward.2} parent=47 // pred_check_branch
        %326 = sbr.rel (%p324) target = $region52
      $region51: #{se_layer_cs_forward.2} parent=47 // pred_region
        %s327 = smul.u32 4, %s27
        %p328 = scmp.lt.s32.totalorder %s26, 1
        %s329 = scalar_select %p328, %s26, 1
        %p330 = scmp.lt.s32.totalorder %s327, 7
        %s331 = scalar_select %p330, %s327, 7
        %s332 = smul.addr %s329, 8
        %s333 = sadd.s32 %s331, %s332
        %s334 = smul.addr %s333, 8
        %s335 = scalar_lea.vmem %s0, %s334
        %s336 = smul.u32 4, %s27
      $region52: #{se_layer_cs_forward.2} parent=47 // pred_fallthru
        _
    $region48: #{se_layer_cs_forward.2} parent=5 // pred_fallthru
      _
    %p337 = scmp.le.s32.totalorder 1, %s19
    %p338 = scmp.lt.s32.totalorder %s19, 5
    %p339 = pnand %p337, %p338
    %p340 = pneg %p339
    // Predicated region
    $region53: #{se_layer_cs_forward.2} parent=5 // pred_check
      _
    $region54: #{se_layer_cs_forward.2} parent=5 // pred_check_branch
      %342 = sbr.rel (%p339) target = $region56
    $region55: #{se_layer_cs_forward.2} parent=5 // pred_region
      %s343 = ssub.s32 %s19, 1
      %s344 = smul.u32 4, %s29
      %p345 = scmp.lt.s32.totalorder %s28, 1
      %s346 = scalar_select %p345, %s28, 1
      %p347 = scmp.lt.s32.totalorder %s344, 7
      %s348 = scalar_select %p347, %s344, 7
      %s349 = smul.addr %s346, 8
      %s350 = sadd.s32 %s348, %s349
      %s351 = smul.addr %s350, 8
      %s352 = scalar_lea.vmem %s0, %s351
      %p353 = pneg %p59
      %p354 = pneg %p56
      %p355 = pneg %p80
      %p356 = pneg %p77
      %p357 = pneg %p101
      %p358 = pneg %p98
      %p359 = pneg %p122
      %p360 = pneg %p119
      %p361 = pneg %p143
      %p362 = pneg %p140
      %p363 = pneg %p164
      %p364 = pneg %p161
      %p365 = pneg %p185
      %p366 = pneg %p182
      %p367 = pneg %p206
      %p368 = pneg %p203
      %p369 = pneg %p227
      %p370 = pneg %p224
      %p371 = pneg %p255
      %p372 = pneg %p252
      %s373 = smul.u32 4, %s29
      %p374 = scmp.lt.s32.totalorder %s28, 1
      %s375 = scalar_select %p374, %s28, 1
      %p376 = scmp.lt.s32.totalorder %s373, 7
      %s377 = scalar_select %p376, %s373, 7
      %s378 = smul.addr %s375, 8
      %s379 = sadd.s32 %s377, %s378
      %s380 = scalar_lea.vmem %s9, %s379
      %p381 = pneg %p281
      %p382 = pneg %p278
      %p383 = scmp.lt.s32.totalorder %s28, 1
      %s384 = scalar_select %p383, %s28, 1
      %s385 = smul.addr %s384, 8
      %s386 = scalar_lea.vmem %s10, %s385
      %s387 = smul.u32 4, %s29
      %p388 = scmp.lt.s32.totalorder %s28, 1
      %s389 = scalar_select %p388, %s28, 1
      %p390 = scmp.lt.s32.totalorder %s387, 7
      %s391 = scalar_select %p390, %s387, 7
      %s392 = smul.addr %s389, 8
      %s393 = sadd.s32 %s391, %s392
      %s394 = smul.addr %s393, 8
      %s395 = scalar_lea.vmem %s0, %s394
      %s396 = smul.u32 4, %s29
      %s397 = smul.u32 4, %s29
      %p398 = scmp.lt.s32.totalorder %s28, 1
      %s399 = scalar_select %p398, %s28, 1
      %p400 = scmp.lt.s32.totalorder %s397, 7
      %s401 = scalar_select %p400, %s397, 7
      %s402 = smul.addr %s399, 8
      %s403 = sadd.s32 %s401, %s402
      %s404 = scalar_lea.vmem %s9, %s403
      %s405 = smul.u32 4, %s29
      %p406 = scmp.lt.s32.totalorder %s28, 1
      %s407 = scalar_select %p406, %s28, 1
      %s408 = smul.addr %s407, 8
      %s409 = scalar_lea.vmem %s10, %s408
      %v410 = vld [vmem:[%s395] sm:$0xff]
      %v411 = vld [vmem:[%s395 + $0x8] sm:$0xff]
      %v412 = vld [vmem:[%s395 + $0x10] sm:$0xff]
      %v413 = vld [vmem:[%s395 + $0x18] sm:$0xff]
      %p414 = scmp.eq.s32.totalorder %s29, 0
      // Predicated region
      $region57: #{se_layer_cs_forward.2} parent=55 // pred_check
        %p415 = pneg %p414
      $region58: #{se_layer_cs_forward.2} parent=55 // pred_check_branch
        %417 = sbr.rel (%p415) target = $region60
      $region59: #{se_layer_cs_forward.2} parent=55 // pred_region
        %vm418 = vcmask 7168
        %419 = vst.msk [vmem:[#allocation2] sm:$0xff] %vm418, 0.0
      $region60: #{se_layer_cs_forward.2} parent=55 // pred_fallthru
        _
      %v420 = vld [vmem:[#allocation2] sm:$0xff]
      %v421 = vadd.f32 %v410, %v411
      %v422 = vadd.f32 %v421, %v412
      %v423 = vadd.f32 %v422, %v413
      %424 = vadd.xlane.f32.xlu0 %v423
      %v425 = vpop.xlane.xlu0 %424
      %v426 = vadd.f32 %v420, %v425
      %vm427 = vcmask 7168
      %428 = vst.msk [vmem:[#allocation2] sm:$0xff] %vm427, %v426
      %v429 = vld [vmem:[%s1] sm:$0xff]
      %vm430 = vcmask 64512
      %v432 = vsel %vm430, %v429, 0
      %434 = vmatpush.msra.mxu0 0.0
      %435 = vmatpush.msra.mxu0 0.0
      %436 = vmatpush.msra.mxu0 0.0
      %437 = vmatpush.msra.mxu0 0.0
      %438 = vmatpush.msra.mxu0 0.0
      %439 = vmatpush.msra.mxu0 0.0
      %440 = vmatpush.msra.mxu0 0.0
      %441 = vmatpush.msra.mxu0 0.0
      %442 = vmatpush.msra.mxu0 0.0
      %443 = vmatpush.msra.mxu0 0.0
      %444 = vmatpush.msra.mxu0 0.0
      %445 = vmatpush.msra.mxu0 0.0
      %446 = vmatpush.msra.mxu0 0.0
      %447 = vmatpush.msra.mxu0 0.0
      %448 = vmatpush.msra.mxu0 0.0
      %v449 = vand.u32 %v410, 4294901760
      %450 = vmatpush.msra.mxu0 %v449
      %v451 = vand.u32 %v432, 4294901760
      %v452 = vsub.f32 %v432, %v451
      %v453 = vand.u32 %v452, 4294901760
      %v454 = vsub.f32 %v452, %v453
      %v455 = vand.u32 %v454, 4294901760
      %456 = vmatmul.f32.gmra.mxu0 %v455
      %v457 = vpop.f32.mrf.mxu0
      %v458 = vadd.f32 0.0, %v457
      %459 = vdwg.mxu0
      %460 = vmatpush.msra.mxu0 0.0
      %461 = vmatpush.msra.mxu0 0.0
      %462 = vmatpush.msra.mxu0 0.0
      %463 = vmatpush.msra.mxu0 0.0
      %464 = vmatpush.msra.mxu0 0.0
      %465 = vmatpush.msra.mxu0 0.0
      %466 = vmatpush.msra.mxu0 0.0
      %467 = vmatpush.msra.mxu0 0.0
      %468 = vmatpush.msra.mxu0 0.0
      %469 = vmatpush.msra.mxu0 0.0
      %470 = vmatpush.msra.mxu0 0.0
      %471 = vmatpush.msra.mxu0 0.0
      %472 = vmatpush.msra.mxu0 0.0
      %473 = vmatpush.msra.mxu0 0.0
      %474 = vmatpush.msra.mxu0 0.0
      %v475 = vand.u32 %v410, 4294901760
      %v476 = vsub.f32 %v410, %v475
      %v477 = vand.u32 %v476, 4294901760
      %v478 = vsub.f32 %v476, %v477
      %v479 = vand.u32 %v478, 4294901760
      %480 = vmatpush.msra.mxu0 %v479
      %v481 = vand.u32 %v432, 4294901760
      %482 = vmatmul.f32.gmra.mxu0 %v481
      %v483 = vpop.f32.mrf.mxu0
      %v484 = vadd.f32 %v458, %v483
      %485 = vdwg.mxu0
      %486 = vmatpush.msra.mxu0 0.0
      %487 = vmatpush.msra.mxu0 0.0
      %488 = vmatpush.msra.mxu0 0.0
      %489 = vmatpush.msra.mxu0 0.0
      %490 = vmatpush.msra.mxu0 0.0
      %491 = vmatpush.msra.mxu0 0.0
      %492 = vmatpush.msra.mxu0 0.0
      %493 = vmatpush.msra.mxu0 0.0
      %494 = vmatpush.msra.mxu0 0.0
      %495 = vmatpush.msra.mxu0 0.0
      %496 = vmatpush.msra.mxu0 0.0
      %497 = vmatpush.msra.mxu0 0.0
      %498 = vmatpush.msra.mxu0 0.0
      %499 = vmatpush.msra.mxu0 0.0
      %500 = vmatpush.msra.mxu0 0.0
      %v501 = vand.u32 %v410, 4294901760
      %v502 = vsub.f32 %v410, %v501
      %503 = vmatpush.msra.mxu0 %v502
      %v504 = vand.u32 %v432, 4294901760
      %v505 = vsub.f32 %v432, %v504
      %506 = vmatmul.f32.gmra.mxu0 %v505
      %v507 = vpop.f32.mrf.mxu0
      %v508 = vadd.f32 %v484, %v507
      %509 = vdwg.mxu0
      %510 = vmatpush.msra.mxu0 0.0
      %511 = vmatpush.msra.mxu0 0.0
      %512 = vmatpush.msra.mxu0 0.0
      %513 = vmatpush.msra.mxu0 0.0
      %514 = vmatpush.msra.mxu0 0.0
      %515 = vmatpush.msra.mxu0 0.0
      %516 = vmatpush.msra.mxu0 0.0
      %517 = vmatpush.msra.mxu0 0.0
      %518 = vmatpush.msra.mxu0 0.0
      %519 = vmatpush.msra.mxu0 0.0
      %520 = vmatpush.msra.mxu0 0.0
      %521 = vmatpush.msra.mxu0 0.0
      %522 = vmatpush.msra.mxu0 0.0
      %523 = vmatpush.msra.mxu0 0.0
      %524 = vmatpush.msra.mxu0 0.0
      %v525 = vand.u32 %v410, 4294901760
      %526 = vmatpush.msra.mxu0 %v525
      %v527 = vand.u32 %v432, 4294901760
      %v528 = vsub.f32 %v432, %v527
      %v529 = vand.u32 %v528, 4294901760
      %530 = vmatmul.f32.gmra.mxu0 %v529
      %v531 = vpop.f32.mrf.mxu0
      %v532 = vadd.f32 %v508, %v531
      %533 = vdwg.mxu0
      %534 = vmatpush.msra.mxu0 0.0
      %535 = vmatpush.msra.mxu0 0.0
      %536 = vmatpush.msra.mxu0 0.0
      %537 = vmatpush.msra.mxu0 0.0
      %538 = vmatpush.msra.mxu0 0.0
      %539 = vmatpush.msra.mxu0 0.0
      %540 = vmatpush.msra.mxu0 0.0
      %541 = vmatpush.msra.mxu0 0.0
      %542 = vmatpush.msra.mxu0 0.0
      %543 = vmatpush.msra.mxu0 0.0
      %544 = vmatpush.msra.mxu0 0.0
      %545 = vmatpush.msra.mxu0 0.0
      %546 = vmatpush.msra.mxu0 0.0
      %547 = vmatpush.msra.mxu0 0.0
      %548 = vmatpush.msra.mxu0 0.0
      %v549 = vand.u32 %v410, 4294901760
      %v550 = vsub.f32 %v410, %v549
      %v551 = vand.u32 %v550, 4294901760
      %552 = vmatpush.msra.mxu0 %v551
      %v553 = vand.u32 %v432, 4294901760
      %554 = vmatmul.f32.gmra.mxu0 %v553
      %v555 = vpop.f32.mrf.mxu0
      %v556 = vadd.f32 %v532, %v555
      %557 = vdwg.mxu0
      %558 = vmatpush.msra.mxu0 0.0
      %559 = vmatpush.msra.mxu0 0.0
      %560 = vmatpush.msra.mxu0 0.0
      %561 = vmatpush.msra.mxu0 0.0
      %562 = vmatpush.msra.mxu0 0.0
      %563 = vmatpush.msra.mxu0 0.0
      %564 = vmatpush.msra.mxu0 0.0
      %565 = vmatpush.msra.mxu0 0.0
      %566 = vmatpush.msra.mxu0 0.0
      %567 = vmatpush.msra.mxu0 0.0
      %568 = vmatpush.msra.mxu0 0.0
      %569 = vmatpush.msra.mxu0 0.0
      %570 = vmatpush.msra.mxu0 0.0
      %571 = vmatpush.msra.mxu0 0.0
      %572 = vmatpush.msra.mxu0 0.0
      %v573 = vand.u32 %v410, 4294901760
      %574 = vmatpush.msra.mxu0 %v573
      %v575 = vand.u32 %v432, 4294901760
      %576 = vmatmul.f32.gmra.mxu0 %v575
      %v577 = vpop.f32.mrf.mxu0
      %v578 = vadd.f32 %v556, %v577
      %579 = vdwg.mxu0
      %580 = vmatpush.msra.mxu0 0.0
      %581 = vmatpush.msra.mxu0 0.0
      %582 = vmatpush.msra.mxu0 0.0
      %583 = vmatpush.msra.mxu0 0.0
      %584 = vmatpush.msra.mxu0 0.0
      %585 = vmatpush.msra.mxu0 0.0
      %586 = vmatpush.msra.mxu0 0.0
      %587 = vmatpush.msra.mxu0 0.0
      %588 = vmatpush.msra.mxu0 0.0
      %589 = vmatpush.msra.mxu0 0.0
      %590 = vmatpush.msra.mxu0 0.0
      %591 = vmatpush.msra.mxu0 0.0
      %592 = vmatpush.msra.mxu0 0.0
      %593 = vmatpush.msra.mxu0 0.0
      %594 = vmatpush.msra.mxu0 0.0
      %v595 = vand.u32 %v411, 4294901760
      %596 = vmatpush.msra.mxu0 %v595
      %v597 = vand.u32 %v432, 4294901760
      %v598 = vsub.f32 %v432, %v597
      %v599 = vand.u32 %v598, 4294901760
      %v600 = vsub.f32 %v598, %v599
      %v601 = vand.u32 %v600, 4294901760
      %602 = vmatmul.f32.gmra.mxu0 %v601
      %v603 = vpop.f32.mrf.mxu0
      %v604 = vadd.f32 0.0, %v603
      %605 = vdwg.mxu0
      %606 = vmatpush.msra.mxu0 0.0
      %607 = vmatpush.msra.mxu0 0.0
      %608 = vmatpush.msra.mxu0 0.0
      %609 = vmatpush.msra.mxu0 0.0
      %610 = vmatpush.msra.mxu0 0.0
      %611 = vmatpush.msra.mxu0 0.0
      %612 = vmatpush.msra.mxu0 0.0
      %613 = vmatpush.msra.mxu0 0.0
      %614 = vmatpush.msra.mxu0 0.0
      %615 = vmatpush.msra.mxu0 0.0
      %616 = vmatpush.msra.mxu0 0.0
      %617 = vmatpush.msra.mxu0 0.0
      %618 = vmatpush.msra.mxu0 0.0
      %619 = vmatpush.msra.mxu0 0.0
      %620 = vmatpush.msra.mxu0 0.0
      %v621 = vand.u32 %v411, 4294901760
      %v622 = vsub.f32 %v411, %v621
      %v623 = vand.u32 %v622, 4294901760
      %v624 = vsub.f32 %v622, %v623
      %v625 = vand.u32 %v624, 4294901760
      %626 = vmatpush.msra.mxu0 %v625
      %v627 = vand.u32 %v432, 4294901760
      %628 = vmatmul.f32.gmra.mxu0 %v627
      %v629 = vpop.f32.mrf.mxu0
      %v630 = vadd.f32 %v604, %v629
      %631 = vdwg.mxu0
      %632 = vmatpush.msra.mxu0 0.0
      %633 = vmatpush.msra.mxu0 0.0
      %634 = vmatpush.msra.mxu0 0.0
      %635 = vmatpush.msra.mxu0 0.0
      %636 = vmatpush.msra.mxu0 0.0
      %637 = vmatpush.msra.mxu0 0.0
      %638 = vmatpush.msra.mxu0 0.0
      %639 = vmatpush.msra.mxu0 0.0
      %640 = vmatpush.msra.mxu0 0.0
      %641 = vmatpush.msra.mxu0 0.0
      %642 = vmatpush.msra.mxu0 0.0
      %643 = vmatpush.msra.mxu0 0.0
      %644 = vmatpush.msra.mxu0 0.0
      %645 = vmatpush.msra.mxu0 0.0
      %646 = vmatpush.msra.mxu0 0.0
      %v647 = vand.u32 %v411, 4294901760
      %v648 = vsub.f32 %v411, %v647
      %649 = vmatpush.msra.mxu0 %v648
      %v650 = vand.u32 %v432, 4294901760
      %v651 = vsub.f32 %v432, %v650
      %652 = vmatmul.f32.gmra.mxu0 %v651
      %v653 = vpop.f32.mrf.mxu0
      %v654 = vadd.f32 %v630, %v653
      %655 = vdwg.mxu0
      %656 = vmatpush.msra.mxu0 0.0
      %657 = vmatpush.msra.mxu0 0.0
      %658 = vmatpush.msra.mxu0 0.0
      %659 = vmatpush.msra.mxu0 0.0
      %660 = vmatpush.msra.mxu0 0.0
      %661 = vmatpush.msra.mxu0 0.0
      %662 = vmatpush.msra.mxu0 0.0
      %663 = vmatpush.msra.mxu0 0.0
      %664 = vmatpush.msra.mxu0 0.0
      %665 = vmatpush.msra.mxu0 0.0
      %666 = vmatpush.msra.mxu0 0.0
      %667 = vmatpush.msra.mxu0 0.0
      %668 = vmatpush.msra.mxu0 0.0
      %669 = vmatpush.msra.mxu0 0.0
      %670 = vmatpush.msra.mxu0 0.0
      %v671 = vand.u32 %v411, 4294901760
      %672 = vmatpush.msra.mxu0 %v671
      %v673 = vand.u32 %v432, 4294901760
      %v674 = vsub.f32 %v432, %v673
      %v675 = vand.u32 %v674, 4294901760
      %676 = vmatmul.f32.gmra.mxu0 %v675
      %v677 = vpop.f32.mrf.mxu0
      %v678 = vadd.f32 %v654, %v677
      %679 = vdwg.mxu0
      %680 = vmatpush.msra.mxu0 0.0
      %681 = vmatpush.msra.mxu0 0.0
      %682 = vmatpush.msra.mxu0 0.0
      %683 = vmatpush.msra.mxu0 0.0
      %684 = vmatpush.msra.mxu0 0.0
      %685 = vmatpush.msra.mxu0 0.0
      %686 = vmatpush.msra.mxu0 0.0
      %687 = vmatpush.msra.mxu0 0.0
      %688 = vmatpush.msra.mxu0 0.0
      %689 = vmatpush.msra.mxu0 0.0
      %690 = vmatpush.msra.mxu0 0.0
      %691 = vmatpush.msra.mxu0 0.0
      %692 = vmatpush.msra.mxu0 0.0
      %693 = vmatpush.msra.mxu0 0.0
      %694 = vmatpush.msra.mxu0 0.0
      %v695 = vand.u32 %v411, 4294901760
      %v696 = vsub.f32 %v411, %v695
      %v697 = vand.u32 %v696, 4294901760
      %698 = vmatpush.msra.mxu0 %v697
      %v699 = vand.u32 %v432, 4294901760
      %700 = vmatmul.f32.gmra.mxu0 %v699
      %v701 = vpop.f32.mrf.mxu0
      %v702 = vadd.f32 %v678, %v701
      %703 = vdwg.mxu0
      %704 = vmatpush.msra.mxu0 0.0
      %705 = vmatpush.msra.mxu0 0.0
      %706 = vmatpush.msra.mxu0 0.0
      %707 = vmatpush.msra.mxu0 0.0
      %708 = vmatpush.msra.mxu0 0.0
      %709 = vmatpush.msra.mxu0 0.0
      %710 = vmatpush.msra.mxu0 0.0
      %711 = vmatpush.msra.mxu0 0.0
      %712 = vmatpush.msra.mxu0 0.0
      %713 = vmatpush.msra.mxu0 0.0
      %714 = vmatpush.msra.mxu0 0.0
      %715 = vmatpush.msra.mxu0 0.0
      %716 = vmatpush.msra.mxu0 0.0
      %717 = vmatpush.msra.mxu0 0.0
      %718 = vmatpush.msra.mxu0 0.0
      %v719 = vand.u32 %v411, 4294901760
      %720 = vmatpush.msra.mxu0 %v719
      %v721 = vand.u32 %v432, 4294901760
      %722 = vmatmul.f32.gmra.mxu0 %v721
      %v723 = vpop.f32.mrf.mxu0
      %v724 = vadd.f32 %v702, %v723
      %725 = vdwg.mxu0
      %726 = vmatpush.msra.mxu0 0.0
      %727 = vmatpush.msra.mxu0 0.0
      %728 = vmatpush.msra.mxu0 0.0
      %729 = vmatpush.msra.mxu0 0.0
      %730 = vmatpush.msra.mxu0 0.0
      %731 = vmatpush.msra.mxu0 0.0
      %732 = vmatpush.msra.mxu0 0.0
      %733 = vmatpush.msra.mxu0 0.0
      %734 = vmatpush.msra.mxu0 0.0
      %735 = vmatpush.msra.mxu0 0.0
      %736 = vmatpush.msra.mxu0 0.0
      %737 = vmatpush.msra.mxu0 0.0
      %738 = vmatpush.msra.mxu0 0.0
      %739 = vmatpush.msra.mxu0 0.0
      %740 = vmatpush.msra.mxu0 0.0
      %v741 = vand.u32 %v412, 4294901760
      %742 = vmatpush.msra.mxu0 %v741
      %v743 = vand.u32 %v432, 4294901760
      %v744 = vsub.f32 %v432, %v743
      %v745 = vand.u32 %v744, 4294901760
      %v746 = vsub.f32 %v744, %v745
      %v747 = vand.u32 %v746, 4294901760
      %748 = vmatmul.f32.gmra.mxu0 %v747
      %v749 = vpop.f32.mrf.mxu0
      %v750 = vadd.f32 0.0, %v749
      %751 = vdwg.mxu0
      %752 = vmatpush.msra.mxu0 0.0
      %753 = vmatpush.msra.mxu0 0.0
      %754 = vmatpush.msra.mxu0 0.0
      %755 = vmatpush.msra.mxu0 0.0
      %756 = vmatpush.msra.mxu0 0.0
      %757 = vmatpush.msra.mxu0 0.0
      %758 = vmatpush.msra.mxu0 0.0
      %759 = vmatpush.msra.mxu0 0.0
      %760 = vmatpush.msra.mxu0 0.0
      %761 = vmatpush.msra.mxu0 0.0
      %762 = vmatpush.msra.mxu0 0.0
      %763 = vmatpush.msra.mxu0 0.0
      %764 = vmatpush.msra.mxu0 0.0
      %765 = vmatpush.msra.mxu0 0.0
      %766 = vmatpush.msra.mxu0 0.0
      %v767 = vand.u32 %v412, 4294901760
      %v768 = vsub.f32 %v412, %v767
      %v769 = vand.u32 %v768, 4294901760
      %v770 = vsub.f32 %v768, %v769
      %v771 = vand.u32 %v770, 4294901760
      %772 = vmatpush.msra.mxu0 %v771
      %v773 = vand.u32 %v432, 4294901760
      %774 = vmatmul.f32.gmra.mxu0 %v773
      %v775 = vpop.f32.mrf.mxu0
      %v776 = vadd.f32 %v750, %v775
      %777 = vdwg.mxu0
      %778 = vmatpush.msra.mxu0 0.0
      %779 = vmatpush.msra.mxu0 0.0
      %780 = vmatpush.msra.mxu0 0.0
      %781 = vmatpush.msra.mxu0 0.0
      %782 = vmatpush.msra.mxu0 0.0
      %783 = vmatpush.msra.mxu0 0.0
      %784 = vmatpush.msra.mxu0 0.0
      %785 = vmatpush.msra.mxu0 0.0
      %786 = vmatpush.msra.mxu0 0.0
      %787 = vmatpush.msra.mxu0 0.0
      %788 = vmatpush.msra.mxu0 0.0
      %789 = vmatpush.msra.mxu0 0.0
      %790 = vmatpush.msra.mxu0 0.0
      %791 = vmatpush.msra.mxu0 0.0
      %792 = vmatpush.msra.mxu0 0.0
      %v793 = vand.u32 %v412, 4294901760
      %v794 = vsub.f32 %v412, %v793
      %795 = vmatpush.msra.mxu0 %v794
      %v796 = vand.u32 %v432, 4294901760
      %v797 = vsub.f32 %v432, %v796
      %798 = vmatmul.f32.gmra.mxu0 %v797
      %v799 = vpop.f32.mrf.mxu0
      %v800 = vadd.f32 %v776, %v799
      %801 = vdwg.mxu0
      %802 = vmatpush.msra.mxu0 0.0
      %803 = vmatpush.msra.mxu0 0.0
      %804 = vmatpush.msra.mxu0 0.0
      %805 = vmatpush.msra.mxu0 0.0
      %806 = vmatpush.msra.mxu0 0.0
      %807 = vmatpush.msra.mxu0 0.0
      %808 = vmatpush.msra.mxu0 0.0
      %809 = vmatpush.msra.mxu0 0.0
      %810 = vmatpush.msra.mxu0 0.0
      %811 = vmatpush.msra.mxu0 0.0
      %812 = vmatpush.msra.mxu0 0.0
      %813 = vmatpush.msra.mxu0 0.0
      %814 = vmatpush.msra.mxu0 0.0
      %815 = vmatpush.msra.mxu0 0.0
      %816 = vmatpush.msra.mxu0 0.0
      %v817 = vand.u32 %v412, 4294901760
      %818 = vmatpush.msra.mxu0 %v817
      %v819 = vand.u32 %v432, 4294901760
      %v820 = vsub.f32 %v432, %v819
      %v821 = vand.u32 %v820, 4294901760
      %822 = vmatmul.f32.gmra.mxu0 %v821
      %v823 = vpop.f32.mrf.mxu0
      %v824 = vadd.f32 %v800, %v823
      %825 = vdwg.mxu0
      %826 = vmatpush.msra.mxu0 0.0
      %827 = vmatpush.msra.mxu0 0.0
      %828 = vmatpush.msra.mxu0 0.0
      %829 = vmatpush.msra.mxu0 0.0
      %830 = vmatpush.msra.mxu0 0.0
      %831 = vmatpush.msra.mxu0 0.0
      %832 = vmatpush.msra.mxu0 0.0
      %833 = vmatpush.msra.mxu0 0.0
      %834 = vmatpush.msra.mxu0 0.0
      %835 = vmatpush.msra.mxu0 0.0
      %836 = vmatpush.msra.mxu0 0.0
      %837 = vmatpush.msra.mxu0 0.0
      %838 = vmatpush.msra.mxu0 0.0
      %839 = vmatpush.msra.mxu0 0.0
      %840 = vmatpush.msra.mxu0 0.0
      %v841 = vand.u32 %v412, 4294901760
      %v842 = vsub.f32 %v412, %v841
      %v843 = vand.u32 %v842, 4294901760
      %844 = vmatpush.msra.mxu0 %v843
      %v845 = vand.u32 %v432, 4294901760
      %846 = vmatmul.f32.gmra.mxu0 %v845
      %v847 = vpop.f32.mrf.mxu0
      %v848 = vadd.f32 %v824, %v847
      %849 = vdwg.mxu0
      %850 = vmatpush.msra.mxu0 0.0
      %851 = vmatpush.msra.mxu0 0.0
      %852 = vmatpush.msra.mxu0 0.0
      %853 = vmatpush.msra.mxu0 0.0
      %854 = vmatpush.msra.mxu0 0.0
      %855 = vmatpush.msra.mxu0 0.0
      %856 = vmatpush.msra.mxu0 0.0
      %857 = vmatpush.msra.mxu0 0.0
      %858 = vmatpush.msra.mxu0 0.0
      %859 = vmatpush.msra.mxu0 0.0
      %860 = vmatpush.msra.mxu0 0.0
      %861 = vmatpush.msra.mxu0 0.0
      %862 = vmatpush.msra.mxu0 0.0
      %863 = vmatpush.msra.mxu0 0.0
      %864 = vmatpush.msra.mxu0 0.0
      %v865 = vand.u32 %v412, 4294901760
      %866 = vmatpush.msra.mxu0 %v865
      %v867 = vand.u32 %v432, 4294901760
      %868 = vmatmul.f32.gmra.mxu0 %v867
      %v869 = vpop.f32.mrf.mxu0
      %v870 = vadd.f32 %v848, %v869
      %871 = vdwg.mxu0
      %872 = vmatpush.msra.mxu0 0.0
      %873 = vmatpush.msra.mxu0 0.0
      %874 = vmatpush.msra.mxu0 0.0
      %875 = vmatpush.msra.mxu0 0.0
      %876 = vmatpush.msra.mxu0 0.0
      %877 = vmatpush.msra.mxu0 0.0
      %878 = vmatpush.msra.mxu0 0.0
      %879 = vmatpush.msra.mxu0 0.0
      %880 = vmatpush.msra.mxu0 0.0
      %881 = vmatpush.msra.mxu0 0.0
      %882 = vmatpush.msra.mxu0 0.0
      %883 = vmatpush.msra.mxu0 0.0
      %884 = vmatpush.msra.mxu0 0.0
      %885 = vmatpush.msra.mxu0 0.0
      %886 = vmatpush.msra.mxu0 0.0
      %v887 = vand.u32 %v413, 4294901760
      %888 = vmatpush.msra.mxu0 %v887
      %v889 = vand.u32 %v432, 4294901760
      %v890 = vsub.f32 %v432, %v889
      %v891 = vand.u32 %v890, 4294901760
      %v892 = vsub.f32 %v890, %v891
      %v893 = vand.u32 %v892, 4294901760
      %894 = vmatmul.f32.gmra.mxu0 %v893
      %v895 = vpop.f32.mrf.mxu0
      %v896 = vadd.f32 0.0, %v895
      %897 = vdwg.mxu0
      %898 = vmatpush.msra.mxu0 0.0
      %899 = vmatpush.msra.mxu0 0.0
      %900 = vmatpush.msra.mxu0 0.0
      %901 = vmatpush.msra.mxu0 0.0
      %902 = vmatpush.msra.mxu0 0.0
      %903 = vmatpush.msra.mxu0 0.0
      %904 = vmatpush.msra.mxu0 0.0
      %905 = vmatpush.msra.mxu0 0.0
      %906 = vmatpush.msra.mxu0 0.0
      %907 = vmatpush.msra.mxu0 0.0
      %908 = vmatpush.msra.mxu0 0.0
      %909 = vmatpush.msra.mxu0 0.0
      %910 = vmatpush.msra.mxu0 0.0
      %911 = vmatpush.msra.mxu0 0.0
      %912 = vmatpush.msra.mxu0 0.0
      %v913 = vand.u32 %v413, 4294901760
      %v914 = vsub.f32 %v413, %v913
      %v915 = vand.u32 %v914, 4294901760
      %v916 = vsub.f32 %v914, %v915
      %v917 = vand.u32 %v916, 4294901760
      %918 = vmatpush.msra.mxu0 %v917
      %v919 = vand.u32 %v432, 4294901760
      %920 = vmatmul.f32.gmra.mxu0 %v919
      %v921 = vpop.f32.mrf.mxu0
      %v922 = vadd.f32 %v896, %v921
      %923 = vdwg.mxu0
      %924 = vmatpush.msra.mxu0 0.0
      %925 = vmatpush.msra.mxu0 0.0
      %926 = vmatpush.msra.mxu0 0.0
      %927 = vmatpush.msra.mxu0 0.0
      %928 = vmatpush.msra.mxu0 0.0
      %929 = vmatpush.msra.mxu0 0.0
      %930 = vmatpush.msra.mxu0 0.0
      %931 = vmatpush.msra.mxu0 0.0
      %932 = vmatpush.msra.mxu0 0.0
      %933 = vmatpush.msra.mxu0 0.0
      %934 = vmatpush.msra.mxu0 0.0
      %935 = vmatpush.msra.mxu0 0.0
      %936 = vmatpush.msra.mxu0 0.0
      %937 = vmatpush.msra.mxu0 0.0
      %938 = vmatpush.msra.mxu0 0.0
      %v939 = vand.u32 %v413, 4294901760
      %v940 = vsub.f32 %v413, %v939
      %941 = vmatpush.msra.mxu0 %v940
      %v942 = vand.u32 %v432, 4294901760
      %v943 = vsub.f32 %v432, %v942
      %944 = vmatmul.f32.gmra.mxu0 %v943
      %v945 = vpop.f32.mrf.mxu0
      %v946 = vadd.f32 %v922, %v945
      %947 = vdwg.mxu0
      %948 = vmatpush.msra.mxu0 0.0
      %949 = vmatpush.msra.mxu0 0.0
      %950 = vmatpush.msra.mxu0 0.0
      %951 = vmatpush.msra.mxu0 0.0
      %952 = vmatpush.msra.mxu0 0.0
      %953 = vmatpush.msra.mxu0 0.0
      %954 = vmatpush.msra.mxu0 0.0
      %955 = vmatpush.msra.mxu0 0.0
      %956 = vmatpush.msra.mxu0 0.0
      %957 = vmatpush.msra.mxu0 0.0
      %958 = vmatpush.msra.mxu0 0.0
      %959 = vmatpush.msra.mxu0 0.0
      %960 = vmatpush.msra.mxu0 0.0
      %961 = vmatpush.msra.mxu0 0.0
      %962 = vmatpush.msra.mxu0 0.0
      %v963 = vand.u32 %v413, 4294901760
      %964 = vmatpush.msra.mxu0 %v963
      %v965 = vand.u32 %v432, 4294901760
      %v966 = vsub.f32 %v432, %v965
      %v967 = vand.u32 %v966, 4294901760
      %968 = vmatmul.f32.gmra.mxu0 %v967
      %v969 = vpop.f32.mrf.mxu0
      %v970 = vadd.f32 %v946, %v969
      %971 = vdwg.mxu0
      %972 = vmatpush.msra.mxu0 0.0
      %973 = vmatpush.msra.mxu0 0.0
      %974 = vmatpush.msra.mxu0 0.0
      %975 = vmatpush.msra.mxu0 0.0
      %976 = vmatpush.msra.mxu0 0.0
      %977 = vmatpush.msra.mxu0 0.0
      %978 = vmatpush.msra.mxu0 0.0
      %979 = vmatpush.msra.mxu0 0.0
      %980 = vmatpush.msra.mxu0 0.0
      %981 = vmatpush.msra.mxu0 0.0
      %982 = vmatpush.msra.mxu0 0.0
      %983 = vmatpush.msra.mxu0 0.0
      %984 = vmatpush.msra.mxu0 0.0
      %985 = vmatpush.msra.mxu0 0.0
      %986 = vmatpush.msra.mxu0 0.0
      %v987 = vand.u32 %v413, 4294901760
      %v988 = vsub.f32 %v413, %v987
      %v989 = vand.u32 %v988, 4294901760
      %990 = vmatpush.msra.mxu0 %v989
      %v991 = vand.u32 %v432, 4294901760
      %992 = vmatmul.f32.gmra.mxu0 %v991
      %v993 = vpop.f32.mrf.mxu0
      %v994 = vadd.f32 %v970, %v993
      %995 = vdwg.mxu0
      %996 = vmatpush.msra.mxu0 0.0
      %997 = vmatpush.msra.mxu0 0.0
      %998 = vmatpush.msra.mxu0 0.0
      %999 = vmatpush.msra.mxu0 0.0
      %1000 = vmatpush.msra.mxu0 0.0
      %1001 = vmatpush.msra.mxu0 0.0
      %1002 = vmatpush.msra.mxu0 0.0
      %1003 = vmatpush.msra.mxu0 0.0
      %1004 = vmatpush.msra.mxu0 0.0
      %1005 = vmatpush.msra.mxu0 0.0
      %1006 = vmatpush.msra.mxu0 0.0
      %1007 = vmatpush.msra.mxu0 0.0
      %1008 = vmatpush.msra.mxu0 0.0
      %1009 = vmatpush.msra.mxu0 0.0
      %1010 = vmatpush.msra.mxu0 0.0
      %v1011 = vand.u32 %v413, 4294901760
      %1012 = vmatpush.msra.mxu0 %v1011
      %v1013 = vand.u32 %v432, 4294901760
      %1014 = vmatmul.f32.gmra.mxu0 %v1013
      %v1015 = vpop.f32.mrf.mxu0
      %v1016 = vadd.f32 %v994, %v1015
      %1017 = vdwg.mxu0
      %v1018 = vld [vmem:[#allocation3] sm:$0x1]
      %1020 = vset.pattern.permute.xlu0 0
      %1021 = vperm.xlu0 %1020, %v1018
      %v1022 = vpop.permute.xlu0 %1021
      %v1024 = vperm.slane %v1022, 0
      %v1025 = vadd.f32 %v578, %v1024
      %v1026 = vadd.f32 %v724, %v1024
      %v1027 = vadd.f32 %v870, %v1024
      %v1028 = vadd.f32 %v1016, %v1024
      %vm1029 = vcmp.gt.f32.partialorder %v1025, 0.0
      %vm1030 = vcmp.gt.f32.partialorder %v1026, 0.0
      %vm1031 = vcmp.gt.f32.partialorder %v1027, 0.0
      %vm1032 = vcmp.gt.f32.partialorder %v1028, 0.0
      %v1033 = vmin.f32 %v1025, 0.0
      %v1034 = vmin.f32 %v1026, 0.0
      %v1035 = vmin.f32 %v1027, 0.0
      %v1036 = vmin.f32 %v1028, 0.0
      %v1037 = vmul.f32 %v1033, 1.442695
      %v1038 = vpow.pop %v1037
      %v1039 = vmul.f32 %v1034, 1.442695
      %v1040 = vpow.pop %v1039
      %v1041 = vmul.f32 %v1035, 1.442695
      %v1042 = vpow.pop %v1041
      %v1043 = vmul.f32 %v1036, 1.442695
      %v1044 = vpow.pop %v1043
      %v1045 = vsub.f32 %v1038, 1.0
      %v1046 = vsub.f32 %v1040, 1.0
      %v1047 = vsub.f32 %v1042, 1.0
      %v1048 = vsub.f32 %v1044, 1.0
      %v1049 = vsel %vm1029, %v1025, %v1045
      %v1050 = vsel %vm1030, %v1026, %v1046
      %v1051 = vsel %vm1031, %v1027, %v1047
      %v1052 = vsel %vm1032, %v1028, %v1048
      %v1057 = vrot.slane %v1050, 7
      %v1058 = vrot.slane %v1051, 6
      %v1059 = vrot.slane %v1052, 5
      %vm1060 = vcmask 1040384
      %v1061 = vsel %vm1060, %v1049, %v1057
      %vm1062 = vcmask 1042434
      %v1063 = vsel %vm1062, %v1058, %v1059
      %vm1064 = vcmask 1041408
      %v1065 = vsel %vm1064, %v1061, %v1063
      %v1067 = vlaneseq
      %vm1068 = vcmp.ge.s32.totalorder %v1067, 0
      %vm1069 = vcmp.lt.s32.totalorder %v1067, 512
      %vm1070 = vmand %vm1068, %vm1069
      %1071 = vst.msk [vmem:[%s404] sm:$0xf] %vm1070, %v1065
      %p1072 = scmp.eq.s32.totalorder %s29, 1
      // Predicated region
      $region61: #{se_layer_cs_forward.2} parent=55 // pred_check
        %p1073 = pneg %p1072
      $region62: #{se_layer_cs_forward.2} parent=55 // pred_check_branch
        %1075 = sbr.rel (%p1073) target = $region64
      $region63: #{se_layer_cs_forward.2} parent=55 // pred_region
        %v1076 = vld [vmem:[#allocation2] sm:$0xff]
        %v1077 = vmul.f32 %v1076, 0.0009765625
        %1079 = vset.pattern.permute.xlu0 0
        %1080 = vperm.xlu0 %1079, %v1077
        %v1081 = vpop.permute.xlu0 %1080
        %v1083 = vld [vmem:[%s3] sm:$0x3]
        %v1085 = vsel %vm430, %v1083, 0
        %1087 = vmatpush.msra.mxu0 0.0
        %1088 = vmatpush.msra.mxu0 0.0
        %1089 = vmatpush.msra.mxu0 0.0
        %1090 = vmatpush.msra.mxu0 0.0
        %1091 = vmatpush.msra.mxu0 0.0
        %1092 = vmatpush.msra.mxu0 0.0
        %1093 = vmatpush.msra.mxu0 0.0
        %1094 = vmatpush.msra.mxu0 0.0
        %1095 = vmatpush.msra.mxu0 0.0
        %1096 = vmatpush.msra.mxu0 0.0
        %1097 = vmatpush.msra.mxu0 0.0
        %1098 = vmatpush.msra.mxu0 0.0
        %1099 = vmatpush.msra.mxu0 0.0
        %1100 = vmatpush.msra.mxu0 0.0
        %1101 = vmatpush.msra.mxu0 0.0
        %v1102 = vand.u32 %v1081, 4294901760
        %1103 = vmatpush.msra.mxu0 %v1102
        %v1104 = vand.u32 %v1085, 4294901760
        %v1105 = vsub.f32 %v1085, %v1104
        %v1106 = vand.u32 %v1105, 4294901760
        %v1107 = vsub.f32 %v1105, %v1106
        %v1108 = vand.u32 %v1107, 4294901760
        %1109 = vmatmul.f32.gmra.mxu0 %v1108
        %v1110 = vpop.f32.mrf.mxu0
        %v1111 = vadd.f32 0.0, %v1110
        %1112 = vdwg.mxu0
        %1113 = vmatpush.msra.mxu0 0.0
        %1114 = vmatpush.msra.mxu0 0.0
        %1115 = vmatpush.msra.mxu0 0.0
        %1116 = vmatpush.msra.mxu0 0.0
        %1117 = vmatpush.msra.mxu0 0.0
        %1118 = vmatpush.msra.mxu0 0.0
        %1119 = vmatpush.msra.mxu0 0.0
        %1120 = vmatpush.msra.mxu0 0.0
        %1121 = vmatpush.msra.mxu0 0.0
        %1122 = vmatpush.msra.mxu0 0.0
        %1123 = vmatpush.msra.mxu0 0.0
        %1124 = vmatpush.msra.mxu0 0.0
        %1125 = vmatpush.msra.mxu0 0.0
        %1126 = vmatpush.msra.mxu0 0.0
        %1127 = vmatpush.msra.mxu0 0.0
        %v1128 = vand.u32 %v1081, 4294901760
        %v1129 = vsub.f32 %v1081, %v1128
        %v1130 = vand.u32 %v1129, 4294901760
        %v1131 = vsub.f32 %v1129, %v1130
        %v1132 = vand.u32 %v1131, 4294901760
        %1133 = vmatpush.msra.mxu0 %v1132
        %v1134 = vand.u32 %v1085, 4294901760
        %1135 = vmatmul.f32.gmra.mxu0 %v1134
        %v1136 = vpop.f32.mrf.mxu0
        %v1137 = vadd.f32 %v1111, %v1136
        %1138 = vdwg.mxu0
        %1139 = vmatpush.msra.mxu0 0.0
        %1140 = vmatpush.msra.mxu0 0.0
        %1141 = vmatpush.msra.mxu0 0.0
        %1142 = vmatpush.msra.mxu0 0.0
        %1143 = vmatpush.msra.mxu0 0.0
        %1144 = vmatpush.msra.mxu0 0.0
        %1145 = vmatpush.msra.mxu0 0.0
        %1146 = vmatpush.msra.mxu0 0.0
        %1147 = vmatpush.msra.mxu0 0.0
        %1148 = vmatpush.msra.mxu0 0.0
        %1149 = vmatpush.msra.mxu0 0.0
        %1150 = vmatpush.msra.mxu0 0.0
        %1151 = vmatpush.msra.mxu0 0.0
        %1152 = vmatpush.msra.mxu0 0.0
        %1153 = vmatpush.msra.mxu0 0.0
        %v1154 = vand.u32 %v1081, 4294901760
        %v1155 = vsub.f32 %v1081, %v1154
        %1156 = vmatpush.msra.mxu0 %v1155
        %v1157 = vand.u32 %v1085, 4294901760
        %v1158 = vsub.f32 %v1085, %v1157
        %1159 = vmatmul.f32.gmra.mxu0 %v1158
        %v1160 = vpop.f32.mrf.mxu0
        %v1161 = vadd.f32 %v1137, %v1160
        %1162 = vdwg.mxu0
        %1163 = vmatpush.msra.mxu0 0.0
        %1164 = vmatpush.msra.mxu0 0.0
        %1165 = vmatpush.msra.mxu0 0.0
        %1166 = vmatpush.msra.mxu0 0.0
        %1167 = vmatpush.msra.mxu0 0.0
        %1168 = vmatpush.msra.mxu0 0.0
        %1169 = vmatpush.msra.mxu0 0.0
        %1170 = vmatpush.msra.mxu0 0.0
        %1171 = vmatpush.msra.mxu0 0.0
        %1172 = vmatpush.msra.mxu0 0.0
        %1173 = vmatpush.msra.mxu0 0.0
        %1174 = vmatpush.msra.mxu0 0.0
        %1175 = vmatpush.msra.mxu0 0.0
        %1176 = vmatpush.msra.mxu0 0.0
        %1177 = vmatpush.msra.mxu0 0.0
        %v1178 = vand.u32 %v1081, 4294901760
        %1179 = vmatpush.msra.mxu0 %v1178
        %v1180 = vand.u32 %v1085, 4294901760
        %v1181 = vsub.f32 %v1085, %v1180
        %v1182 = vand.u32 %v1181, 4294901760
        %1183 = vmatmul.f32.gmra.mxu0 %v1182
        %v1184 = vpop.f32.mrf.mxu0
        %v1185 = vadd.f32 %v1161, %v1184
        %1186 = vdwg.mxu0
        %1187 = vmatpush.msra.mxu0 0.0
        %1188 = vmatpush.msra.mxu0 0.0
        %1189 = vmatpush.msra.mxu0 0.0
        %1190 = vmatpush.msra.mxu0 0.0
        %1191 = vmatpush.msra.mxu0 0.0
        %1192 = vmatpush.msra.mxu0 0.0
        %1193 = vmatpush.msra.mxu0 0.0
        %1194 = vmatpush.msra.mxu0 0.0
        %1195 = vmatpush.msra.mxu0 0.0
        %1196 = vmatpush.msra.mxu0 0.0
        %1197 = vmatpush.msra.mxu0 0.0
        %1198 = vmatpush.msra.mxu0 0.0
        %1199 = vmatpush.msra.mxu0 0.0
        %1200 = vmatpush.msra.mxu0 0.0
        %1201 = vmatpush.msra.mxu0 0.0
        %v1202 = vand.u32 %v1081, 4294901760
        %v1203 = vsub.f32 %v1081, %v1202
        %v1204 = vand.u32 %v1203, 4294901760
        %1205 = vmatpush.msra.mxu0 %v1204
        %v1206 = vand.u32 %v1085, 4294901760
        %1207 = vmatmul.f32.gmra.mxu0 %v1206
        %v1208 = vpop.f32.mrf.mxu0
        %v1209 = vadd.f32 %v1185, %v1208
        %1210 = vdwg.mxu0
        %1211 = vmatpush.msra.mxu0 0.0
        %1212 = vmatpush.msra.mxu0 0.0
        %1213 = vmatpush.msra.mxu0 0.0
        %1214 = vmatpush.msra.mxu0 0.0
        %1215 = vmatpush.msra.mxu0 0.0
        %1216 = vmatpush.msra.mxu0 0.0
        %1217 = vmatpush.msra.mxu0 0.0
        %1218 = vmatpush.msra.mxu0 0.0
        %1219 = vmatpush.msra.mxu0 0.0
        %1220 = vmatpush.msra.mxu0 0.0
        %1221 = vmatpush.msra.mxu0 0.0
        %1222 = vmatpush.msra.mxu0 0.0
        %1223 = vmatpush.msra.mxu0 0.0
        %1224 = vmatpush.msra.mxu0 0.0
        %1225 = vmatpush.msra.mxu0 0.0
        %v1226 = vand.u32 %v1081, 4294901760
        %1227 = vmatpush.msra.mxu0 %v1226
        %v1228 = vand.u32 %v1085, 4294901760
        %1229 = vmatmul.f32.gmra.mxu0 %v1228
        %v1230 = vpop.f32.mrf.mxu0
        %v1231 = vadd.f32 %v1209, %v1230
        %1232 = vdwg.mxu0
        %v1233 = vld [vmem:[%s4] sm:$0x3]
        %1235 = vset.pattern.permute.xlu0 0
        %1236 = vperm.xlu0 %1235, %v1233
        %v1237 = vpop.permute.xlu0 %1236
        %v1239 = vmul.f32 %v1231, %v1237
        %v1240 = vld [vmem:[%s5] sm:$0x3]
        %1242 = vset.pattern.permute.xlu0 0
        %1243 = vperm.xlu0 %1242, %v1240
        %v1244 = vpop.permute.xlu0 %1243
        %v1246 = vadd.f32 %v1239, %v1244
        %vm1247 = vcmp.gt.f32.partialorder %v1246, 0.0
        %v1248 = vmin.f32 %v1246, 0.0
        %v1249 = vmul.f32 %v1248, 1.442695
        %v1250 = vpow.pop %v1249
        %v1251 = vsub.f32 %v1250, 1.0
        %v1252 = vsel %vm1247, %v1246, %v1251
        %v1253 = vld [vmem:[%s6] sm:$0xff]
        %vm1254 = vcmask 15360
        %v1256 = vsel %vm1254, %v1253, 0
        %v1259 = vsel %vm1064, %v1252, 0
        %1261 = vmatpush.msra.mxu0 0.0
        %1262 = vmatpush.msra.mxu0 0.0
        %1263 = vmatpush.msra.mxu0 0.0
        %1264 = vmatpush.msra.mxu0 0.0
        %1265 = vmatpush.msra.mxu0 0.0
        %1266 = vmatpush.msra.mxu0 0.0
        %1267 = vmatpush.msra.mxu0 0.0
        %1268 = vmatpush.msra.mxu0 0.0
        %1269 = vmatpush.msra.mxu0 0.0
        %1270 = vmatpush.msra.mxu0 0.0
        %1271 = vmatpush.msra.mxu0 0.0
        %1272 = vmatpush.msra.mxu0 0.0
        %1273 = vmatpush.msra.mxu0 0.0
        %1274 = vmatpush.msra.mxu0 0.0
        %1275 = vmatpush.msra.mxu0 0.0
        %v1276 = vand.u32 %v1259, 4294901760
        %1277 = vmatpush.msra.mxu0 %v1276
        %v1278 = vand.u32 %v1256, 4294901760
        %v1279 = vsub.f32 %v1256, %v1278
        %v1280 = vand.u32 %v1279, 4294901760
        %v1281 = vsub.f32 %v1279, %v1280
        %v1282 = vand.u32 %v1281, 4294901760
        %1283 = vmatmul.f32.gmra.mxu0 %v1282
        %v1284 = vpop.f32.mrf.mxu0
        %v1285 = vadd.f32 0.0, %v1284
        %1286 = vdwg.mxu0
        %1287 = vmatpush.msra.mxu0 0.0
        %1288 = vmatpush.msra.mxu0 0.0
        %1289 = vmatpush.msra.mxu0 0.0
        %1290 = vmatpush.msra.mxu0 0.0
        %1291 = vmatpush.msra.mxu0 0.0
        %1292 = vmatpush.msra.mxu0 0.0
        %1293 = vmatpush.msra.mxu0 0.0
        %1294 = vmatpush.msra.mxu0 0.0
        %1295 = vmatpush.msra.mxu0 0.0
        %1296 = vmatpush.msra.mxu0 0.0
        %1297 = vmatpush.msra.mxu0 0.0
        %1298 = vmatpush.msra.mxu0 0.0
        %1299 = vmatpush.msra.mxu0 0.0
        %1300 = vmatpush.msra.mxu0 0.0
        %1301 = vmatpush.msra.mxu0 0.0
        %v1302 = vand.u32 %v1259, 4294901760
        %v1303 = vsub.f32 %v1259, %v1302
        %v1304 = vand.u32 %v1303, 4294901760
        %v1305 = vsub.f32 %v1303, %v1304
        %v1306 = vand.u32 %v1305, 4294901760
        %1307 = vmatpush.msra.mxu0 %v1306
        %v1308 = vand.u32 %v1256, 4294901760
        %1309 = vmatmul.f32.gmra.mxu0 %v1308
        %v1310 = vpop.f32.mrf.mxu0
        %v1311 = vadd.f32 %v1285, %v1310
        %1312 = vdwg.mxu0
        %1313 = vmatpush.msra.mxu0 0.0
        %1314 = vmatpush.msra.mxu0 0.0
        %1315 = vmatpush.msra.mxu0 0.0
        %1316 = vmatpush.msra.mxu0 0.0
        %1317 = vmatpush.msra.mxu0 0.0
        %1318 = vmatpush.msra.mxu0 0.0
        %1319 = vmatpush.msra.mxu0 0.0
        %1320 = vmatpush.msra.mxu0 0.0
        %1321 = vmatpush.msra.mxu0 0.0
        %1322 = vmatpush.msra.mxu0 0.0
        %1323 = vmatpush.msra.mxu0 0.0
        %1324 = vmatpush.msra.mxu0 0.0
        %1325 = vmatpush.msra.mxu0 0.0
        %1326 = vmatpush.msra.mxu0 0.0
        %1327 = vmatpush.msra.mxu0 0.0
        %v1328 = vand.u32 %v1259, 4294901760
        %v1329 = vsub.f32 %v1259, %v1328
        %1330 = vmatpush.msra.mxu0 %v1329
        %v1331 = vand.u32 %v1256, 4294901760
        %v1332 = vsub.f32 %v1256, %v1331
        %1333 = vmatmul.f32.gmra.mxu0 %v1332
        %v1334 = vpop.f32.mrf.mxu0
        %v1335 = vadd.f32 %v1311, %v1334
        %1336 = vdwg.mxu0
        %1337 = vmatpush.msra.mxu0 0.0
        %1338 = vmatpush.msra.mxu0 0.0
        %1339 = vmatpush.msra.mxu0 0.0
        %1340 = vmatpush.msra.mxu0 0.0
        %1341 = vmatpush.msra.mxu0 0.0
        %1342 = vmatpush.msra.mxu0 0.0
        %1343 = vmatpush.msra.mxu0 0.0
        %1344 = vmatpush.msra.mxu0 0.0
        %1345 = vmatpush.msra.mxu0 0.0
        %1346 = vmatpush.msra.mxu0 0.0
        %1347 = vmatpush.msra.mxu0 0.0
        %1348 = vmatpush.msra.mxu0 0.0
        %1349 = vmatpush.msra.mxu0 0.0
        %1350 = vmatpush.msra.mxu0 0.0
        %1351 = vmatpush.msra.mxu0 0.0
        %v1352 = vand.u32 %v1259, 4294901760
        %1353 = vmatpush.msra.mxu0 %v1352
        %v1354 = vand.u32 %v1256, 4294901760
        %v1355 = vsub.f32 %v1256, %v1354
        %v1356 = vand.u32 %v1355, 4294901760
        %1357 = vmatmul.f32.gmra.mxu0 %v1356
        %v1358 = vpop.f32.mrf.mxu0
        %v1359 = vadd.f32 %v1335, %v1358
        %1360 = vdwg.mxu0
        %1361 = vmatpush.msra.mxu0 0.0
        %1362 = vmatpush.msra.mxu0 0.0
        %1363 = vmatpush.msra.mxu0 0.0
        %1364 = vmatpush.msra.mxu0 0.0
        %1365 = vmatpush.msra.mxu0 0.0
        %1366 = vmatpush.msra.mxu0 0.0
        %1367 = vmatpush.msra.mxu0 0.0
        %1368 = vmatpush.msra.mxu0 0.0
        %1369 = vmatpush.msra.mxu0 0.0
        %1370 = vmatpush.msra.mxu0 0.0
        %1371 = vmatpush.msra.mxu0 0.0
        %1372 = vmatpush.msra.mxu0 0.0
        %1373 = vmatpush.msra.mxu0 0.0
        %1374 = vmatpush.msra.mxu0 0.0
        %1375 = vmatpush.msra.mxu0 0.0
        %v1376 = vand.u32 %v1259, 4294901760
        %v1377 = vsub.f32 %v1259, %v1376
        %v1378 = vand.u32 %v1377, 4294901760
        %1379 = vmatpush.msra.mxu0 %v1378
        %v1380 = vand.u32 %v1256, 4294901760
        %1381 = vmatmul.f32.gmra.mxu0 %v1380
        %v1382 = vpop.f32.mrf.mxu0
        %v1383 = vadd.f32 %v1359, %v1382
        %1384 = vdwg.mxu0
        %1385 = vmatpush.msra.mxu0 0.0
        %1386 = vmatpush.msra.mxu0 0.0
        %1387 = vmatpush.msra.mxu0 0.0
        %1388 = vmatpush.msra.mxu0 0.0
        %1389 = vmatpush.msra.mxu0 0.0
        %1390 = vmatpush.msra.mxu0 0.0
        %1391 = vmatpush.msra.mxu0 0.0
        %1392 = vmatpush.msra.mxu0 0.0
        %1393 = vmatpush.msra.mxu0 0.0
        %1394 = vmatpush.msra.mxu0 0.0
        %1395 = vmatpush.msra.mxu0 0.0
        %1396 = vmatpush.msra.mxu0 0.0
        %1397 = vmatpush.msra.mxu0 0.0
        %1398 = vmatpush.msra.mxu0 0.0
        %1399 = vmatpush.msra.mxu0 0.0
        %v1400 = vand.u32 %v1259, 4294901760
        %1401 = vmatpush.msra.mxu0 %v1400
        %v1402 = vand.u32 %v1256, 4294901760
        %1403 = vmatmul.f32.gmra.mxu0 %v1402
        %v1404 = vpop.f32.mrf.mxu0
        %v1405 = vadd.f32 %v1383, %v1404
        %1406 = vdwg.mxu0
        %v1407 = vld [vmem:[%s7] sm:$0xff]
        %1409 = vset.pattern.permute.xlu0 0
        %1410 = vperm.xlu0 %1409, %v1407
        %v1411 = vpop.permute.xlu0 %1410
        %v1413 = vmul.f32 %v1405, %v1411
        %v1414 = vld [vmem:[%s8] sm:$0xff]
        %1416 = vset.pattern.permute.xlu0 0
        %1417 = vperm.xlu0 %1416, %v1414
        %v1418 = vpop.permute.xlu0 %1417
        %v1420 = vadd.f32 %v1413, %v1418
        %v1421 = vsub.f32 0.0, %v1420
        %v1422 = vmul.f32 %v1421, 1.442695
        %v1423 = vpow.pop %v1422
        %v1424 = vadd.f32 %v1423, 1.0
        %v1425 = vrcp.pop %v1424
        %v1426 = vmul.f32 %v1424, %v1425
        %v1427 = vsub.f32 1.0, %v1426
        %v1428 = vmul.f32 %v1425, %v1427
        %v1429 = vadd.f32 %v1425, %v1428
        %vm1430 = vweird.f32 %v1424
        %vm1431 = vweird.f32 %v1425
        %vm1432 = vmor %vm1430, %vm1431
        %v1433 = vsel %vm1432, %v1425, %v1429
        %v1434 = vand.u32 2147483647, %v1424
        %vm1435 = vcmp.eq.f32.partialorder %v1434, 8.507059e+37
        %v1436 = vand.u32 %v1424, 2147483648
        %v1437 = vor.u32 1.1754944e-38, %v1436
        %v1438 = vsel %vm1435, %v1437, %v1433
        %v1439 = vmul.f32 1.0, %v1438
        %1440 = vst.msk [vmem:[%s409] sm:$0xff] %vm427, %v1439
      $region64: #{se_layer_cs_forward.2} parent=55 // pred_fallthru
        _
      %s1441 = smul.u32 4, %s29
      %p1442 = scmp.lt.s32.totalorder %s28, 1
      %s1443 = scalar_select %p1442, %s28, 1
      %p1444 = scmp.lt.s32.totalorder %s1441, 7
      %s1445 = scalar_select %p1444, %s1441, 7
      %s1446 = smul.addr %s1443, 8
      %s1447 = sadd.s32 %s1445, %s1446
      %s1448 = scalar_lea.vmem %s9, %s1447
      %p1449 = scmp.lt.s32.totalorder %s28, 1
      %s1450 = scalar_select %p1449, %s28, 1
      %s1451 = smul.addr %s1450, 8
      %s1452 = scalar_lea.vmem %s10, %s1451
      // Predicated region
      $region65: #{se_layer_cs_forward.2} parent=55 // pred_check
        %p1453 = pneg %p252
      $region66: #{se_layer_cs_forward.2} parent=55 // pred_check_branch
        %1455 = sbr.rel (%p1453) target = $region68
      $region67: #{se_layer_cs_forward.2} parent=55 // pred_region
        %s1456 = smul.u32 4, %s29
      $region68: #{se_layer_cs_forward.2} parent=55 // pred_fallthru
        _
      // Predicated region
      $region69: #{se_layer_cs_forward.2} parent=55 // pred_check
        %p1457 = pneg %p278
      $region70: #{se_layer_cs_forward.2} parent=55 // pred_check_branch
        %1459 = sbr.rel (%p1457) target = $region72
      $region71: #{se_layer_cs_forward.2} parent=55 // pred_region
        _
      $region72: #{se_layer_cs_forward.2} parent=55 // pred_fallthru
        _
    $region56: #{se_layer_cs_forward.2} parent=5 // pred_fallthru
      _
    %p1460 = scmp.le.s32.totalorder 2, %s19
    // Predicated region
    $region73: #{se_layer_cs_forward.2} parent=5 // pred_check
      %p1461 = pneg %p1460
    $region74: #{se_layer_cs_forward.2} parent=5 // pred_check_branch
      %1463 = sbr.rel (%p1461) target = $region76
    $region75: #{se_layer_cs_forward.2} parent=5 // pred_region
      %s1464 = ssub.s32 %s19, 2
      // Predicated region
      $region77: #{se_layer_cs_forward.2} parent=75 // pred_check
        %p1465 = pneg %p258
      $region78: #{se_layer_cs_forward.2} parent=75 // pred_check_branch
        %1467 = sbr.rel (%p1465) target = $region80
      $region79: #{se_layer_cs_forward.2} parent=75 // pred_region
        %s1468 = smul.u32 4, %s31
        %p1469 = scmp.lt.s32.totalorder %s30, 1
        %s1470 = scalar_select %p1469, %s30, 1
        %p1471 = scmp.lt.s32.totalorder %s1468, 7
        %s1472 = scalar_select %p1471, %s1468, 7
        %s1473 = smul.addr %s1470, 8
        %s1474 = sadd.s32 %s1472, %s1473
        %s1475 = scalar_lea.vmem %s9, %s1474
      $region80: #{se_layer_cs_forward.2} parent=75 // pred_fallthru
        _
      // Predicated region
      $region81: #{se_layer_cs_forward.2} parent=75 // pred_check
        %p1476 = pneg %p284
      $region82: #{se_layer_cs_forward.2} parent=75 // pred_check_branch
        %1478 = sbr.rel (%p1476) target = $region84
      $region83: #{se_layer_cs_forward.2} parent=75 // pred_region
        %p1479 = scmp.lt.s32.totalorder %s30, 1
        %s1480 = scalar_select %p1479, %s30, 1
        %s1481 = smul.addr %s1480, 8
        %s1482 = scalar_lea.vmem %s10, %s1481
      $region84: #{se_layer_cs_forward.2} parent=75 // pred_fallthru
        _
    $region76: #{se_layer_cs_forward.2} parent=5 // pred_fallthru
      _
  $region6: #{se_layer_cs_forward.2} parent=0 // loop_footer
    %s23 = sadd.s32 1, %s19
  $region7: #{se_layer_cs_forward.2} parent=0 // loop_footer_branch
    %18 = sbr.rel target = $region3
  $region8: #{se_layer_cs_forward.2} parent=0 // loop_exit
    _

// kernel: se_layer_cs_forward.3
$region0: #{se_layer_cs_forward.3}
  #allocation0 [shape = 'u32[]', space=smem, size = 0x4, offset = 0x4, fixed_abs, tag = 'smem constant byte address 0x4 - core index']
  #allocation1 [shape = 'u32[72,128]{1,0:T(1,128)}', space=vmem, size = 0x9000, scoped, tag = 'internal scratch']
  %s0 = inlined_call_operand.vmem [shape: f32[2,8,1024], index: 0, kind: input, shape index: {}]
  %s1 = inlined_call_operand.vmem [shape: f32[2,8,1], index: 1, kind: input, shape index: {}]
  %s2 = inlined_call_operand.vmem [shape: f32[2,1,1024], index: 2, kind: input, shape index: {}]
  %s3 = inlined_call_operand.vmem [shape: f32[8,1], index: 3, kind: input, shape index: {}]
  %s4 = inlined_call_operand.vmem [shape: f32[8,1], index: 4, kind: input, shape index: {}]
  %s5 = inlined_call_operand.vmem [shape: f32[2,8,1024], index: 5, kind: output, shape index: {}]
  %s6 = sld [smem:[#allocation0]]
  $region53: #{se_layer_cs_forward.3} parent=0
    _
  %s8 = ssub.s32 1, %s6
  %s9 = scalar_select 0, %s8, %s6
  loop: start=0, step=1, limit=6
  $region2: #{se_layer_cs_forward.3} parent=0 // loop_pre_header
    _
  $region3: #{se_layer_cs_forward.3} parent=0 // loop_header
    %s11 = sphi 0, %s15
    %p12 = scmp.ge.s32.totalorder %s11, 6
    %s18 = sphi 0, %s30
    %s19 = sphi 0, %s26
    %s20 = sphi 0, %s18
    %s21 = sphi 0, %s19
    %s22 = sphi 0, %s20
    %s23 = sphi 0, %s21
    %s35 = sphi 0, %s37
    %s38 = sphi 0, %s35
    %s39 = sphi 0, %s38
    %s55 = sphi 0, %s39
    %s61 = sphi 0, %s63
    %s64 = sphi 0, %s61
    %s65 = sphi 0, %s64
    %s81 = sphi 0, %s65
    %s89 = sphi 0, %s91
    %s92 = sphi 0, %s89
    %s93 = sphi 0, %s92
    %s109 = sphi 0, %s93
    %s113 = sphi 0, %s113
    %s115 = sphi 0, %s113
    %s116 = sphi 0, %s115
    %s130 = sphi 0, %s116
    %s134 = sphi 0, %s134
    %s136 = sphi 0, %s134
    %s137 = sphi 0, %s136
    %s151 = sphi 0, %s137
    %s159 = sphi 0, %s161
    %s162 = sphi 0, %s159
    %s163 = sphi 0, %s162
    %s179 = sphi 0, %s163
  $region4: #{se_layer_cs_forward.3} parent=0 // loop_header_branch
    %14 = sbr.rel (%p12) target = $region8
  $region5: #{se_layer_cs_forward.3} parent=0 // loop_body
    %s16 = ssub.s32 %s11, 1
    %s17 = ssub.s32 %s11, 2
    %s24 = sadd.s32 1, %s19
    %p25 = scmp.ge.s32.totalorder %s24, 2
    %s26 = scalar_select %p25, 0, %s24
    %s27 = sadd.s32 1, %s18
    %s28 = scalar_select %p25, %s27, %s18
    %p29 = scmp.ge.s32.totalorder %s28, 2
    %s30 = scalar_select %p29, 0, %s28
    %s31 = ssub.s32 %s18, %s30
    %s32 = ssub.s32 %s19, %s26
    %s33 = sor.u32 %s31, %s32
    %p34 = scmp.eq.s32.totalorder %s33, 0
    %s36 = sadd.s32 %s35, 1
    %s37 = scalar_select %p34, %s35, %s36
    %p40 = pneg %p34
    %p41 = scmp.eq.s32.totalorder %s11, 3
    %p42 = por %p40, %p41
    %p43 = scmp.ne.s32.totalorder %s35, %s38
    %p44 = scmp.eq.s32.totalorder %s11, 0
    %p45 = por %p43, %p44
    %p46 = scmp.ne.s32.totalorder %s35, %s38
    %p47 = scmp.eq.s32.totalorder %s16, 3
    %p48 = por %p46, %p47
    %p49 = scmp.ne.s32.totalorder %s38, %s39
    %p50 = scmp.eq.s32.totalorder %s16, 0
    %p51 = por %p49, %p50
    %p52 = scmp.ne.s32.totalorder %s38, %s39
    %p53 = scmp.eq.s32.totalorder %s17, 3
    %p54 = por %p52, %p53
    %p56 = scmp.ne.s32.totalorder %s39, %s55
    %p57 = scmp.eq.s32.totalorder %s17, 0
    %p58 = por %p56, %p57
    %s59 = ssub.s32 %s18, %s30
    %p60 = scmp.eq.s32.totalorder %s59, 0
    %s62 = sadd.s32 %s61, 1
    %s63 = scalar_select %p60, %s61, %s62
    %p66 = pneg %p60
    %p67 = scmp.eq.s32.totalorder %s11, 3
    %p68 = por %p66, %p67
    %p69 = scmp.ne.s32.totalorder %s61, %s64
    %p70 = scmp.eq.s32.totalorder %s11, 0
    %p71 = por %p69, %p70
    %p72 = scmp.ne.s32.totalorder %s61, %s64
    %p73 = scmp.eq.s32.totalorder %s16, 3
    %p74 = por %p72, %p73
    %p75 = scmp.ne.s32.totalorder %s64, %s65
    %p76 = scmp.eq.s32.totalorder %s16, 0
    %p77 = por %p75, %p76
    %p78 = scmp.ne.s32.totalorder %s64, %s65
    %p79 = scmp.eq.s32.totalorder %s17, 3
    %p80 = por %p78, %p79
    %p82 = scmp.ne.s32.totalorder %s65, %s81
    %p83 = scmp.eq.s32.totalorder %s17, 0
    %p84 = por %p82, %p83
    %s85 = ssub.s32 %s18, %s30
    %s86 = ssub.s32 %s19, %s26
    %s87 = sor.u32 %s85, %s86
    %p88 = scmp.eq.s32.totalorder %s87, 0
    %s90 = sadd.s32 %s89, 1
    %s91 = scalar_select %p88, %s89, %s90
    %p94 = pneg %p88
    %p95 = scmp.eq.s32.totalorder %s11, 3
    %p96 = por %p94, %p95
    %p97 = scmp.ne.s32.totalorder %s89, %s92
    %p98 = scmp.eq.s32.totalorder %s11, 0
    %p99 = por %p97, %p98
    %p100 = scmp.ne.s32.totalorder %s89, %s92
    %p101 = scmp.eq.s32.totalorder %s16, 3
    %p102 = por %p100, %p101
    %p103 = scmp.ne.s32.totalorder %s92, %s93
    %p104 = scmp.eq.s32.totalorder %s16, 0
    %p105 = por %p103, %p104
    %p106 = scmp.ne.s32.totalorder %s92, %s93
    %p107 = scmp.eq.s32.totalorder %s17, 3
    %p108 = por %p106, %p107
    %p110 = scmp.ne.s32.totalorder %s93, %s109
    %p111 = scmp.eq.s32.totalorder %s17, 0
    %p112 = por %p110, %p111
    %s114 = sadd.s32 %s113, 1
    %p117 = scmp.eq.s32.totalorder %s11, 3
    %p118 = scmp.ne.s32.totalorder %s113, %s115
    %p119 = scmp.eq.s32.totalorder %s11, 0
    %p120 = por %p118, %p119
    %p121 = scmp.ne.s32.totalorder %s113, %s115
    %p122 = scmp.eq.s32.totalorder %s16, 3
    %p123 = por %p121, %p122
    %p124 = scmp.ne.s32.totalorder %s115, %s116
    %p125 = scmp.eq.s32.totalorder %s16, 0
    %p126 = por %p124, %p125
    %p127 = scmp.ne.s32.totalorder %s115, %s116
    %p128 = scmp.eq.s32.totalorder %s17, 3
    %p129 = por %p127, %p128
    %p131 = scmp.ne.s32.totalorder %s116, %s130
    %p132 = scmp.eq.s32.totalorder %s17, 0
    %p133 = por %p131, %p132
    %s135 = sadd.s32 %s134, 1
    %p138 = scmp.eq.s32.totalorder %s11, 3
    %p139 = scmp.ne.s32.totalorder %s134, %s136
    %p140 = scmp.eq.s32.totalorder %s11, 0
    %p141 = por %p139, %p140
    %p142 = scmp.ne.s32.totalorder %s134, %s136
    %p143 = scmp.eq.s32.totalorder %s16, 3
    %p144 = por %p142, %p143
    %p145 = scmp.ne.s32.totalorder %s136, %s137
    %p146 = scmp.eq.s32.totalorder %s16, 0
    %p147 = por %p145, %p146
    %p148 = scmp.ne.s32.totalorder %s136, %s137
    %p149 = scmp.eq.s32.totalorder %s17, 3
    %p150 = por %p148, %p149
    %p152 = scmp.ne.s32.totalorder %s137, %s151
    %p153 = scmp.eq.s32.totalorder %s17, 0
    %p154 = por %p152, %p153
    %s155 = ssub.s32 %s18, %s30
    %s156 = ssub.s32 %s19, %s26
    %s157 = sor.u32 %s155, %s156
    %p158 = scmp.eq.s32.totalorder %s157, 0
    %s160 = sadd.s32 %s159, 1
    %s161 = scalar_select %p158, %s159, %s160
    %p164 = pneg %p158
    %p165 = scmp.eq.s32.totalorder %s11, 3
    %p166 = por %p164, %p165
    %p167 = scmp.ne.s32.totalorder %s159, %s162
    %p168 = scmp.eq.s32.totalorder %s11, 0
    %p169 = por %p167, %p168
    %p170 = scmp.ne.s32.totalorder %s159, %s162
    %p171 = scmp.eq.s32.totalorder %s16, 3
    %p172 = por %p170, %p171
    %p173 = scmp.ne.s32.totalorder %s162, %s163
    %p174 = scmp.eq.s32.totalorder %s16, 0
    %p175 = por %p173, %p174
    %p176 = scmp.ne.s32.totalorder %s162, %s163
    %p177 = scmp.eq.s32.totalorder %s17, 3
    %p178 = por %p176, %p177
    %p180 = scmp.ne.s32.totalorder %s163, %s179
    %p181 = scmp.eq.s32.totalorder %s17, 0
    %p182 = por %p180, %p181
    %p183 = scmp.le.s32.totalorder 1, %s11
    %p184 = scmp.lt.s32.totalorder %s11, 5
    %p185 = pnand %p183, %p184
    %p186 = pneg %p185
    // Predicated region
    $region9: #{se_layer_cs_forward.3} parent=5 // pred_check
      _
    $region10: #{se_layer_cs_forward.3} parent=5 // pred_check_branch
      %188 = sbr.rel (%p185) target = $region12
    $region11: #{se_layer_cs_forward.3} parent=5 // pred_region
      %s189 = ssub.s32 %s11, 1
      // Predicated region
      $region13: #{se_layer_cs_forward.3} parent=11 // pred_check
        %p190 = pneg %p126
      $region14: #{se_layer_cs_forward.3} parent=11 // pred_check_branch
        %192 = sbr.rel (%p190) target = $region16
      $region15: #{se_layer_cs_forward.3} parent=11 // pred_region
        _
      $region16: #{se_layer_cs_forward.3} parent=11 // pred_fallthru
        _
      // Predicated region
      $region17: #{se_layer_cs_forward.3} parent=11 // pred_check
        %p193 = pneg %p147
      $region18: #{se_layer_cs_forward.3} parent=11 // pred_check_branch
        %195 = sbr.rel (%p193) target = $region20
      $region19: #{se_layer_cs_forward.3} parent=11 // pred_region
        _
      $region20: #{se_layer_cs_forward.3} parent=11 // pred_fallthru
        _
    $region12: #{se_layer_cs_forward.3} parent=5 // pred_fallthru
      _
    %p196 = scmp.lt.s32.totalorder %s11, 4
    // Predicated region
    $region21: #{se_layer_cs_forward.3} parent=5 // pred_check
      %p197 = pneg %p196
    $region22: #{se_layer_cs_forward.3} parent=5 // pred_check_branch
      %199 = sbr.rel (%p197) target = $region24
    $region23: #{se_layer_cs_forward.3} parent=5 // pred_region
      // Predicated region
      $region25: #{se_layer_cs_forward.3} parent=23 // pred_check
        %p200 = pneg %p45
      $region26: #{se_layer_cs_forward.3} parent=23 // pred_check_branch
        %202 = sbr.rel (%p200) target = $region28
      $region27: #{se_layer_cs_forward.3} parent=23 // pred_region
        %s203 = smul.u32 4, %s19
        %p204 = scmp.lt.s32.totalorder %s18, 1
        %s205 = scalar_select %p204, %s18, 1
        %p206 = scmp.lt.s32.totalorder %s203, 7
        %s207 = scalar_select %p206, %s203, 7
        %s208 = smul.addr %s205, 8
        %s209 = sadd.s32 %s207, %s208
        %s210 = smul.addr %s209, 8
        %s211 = scalar_lea.vmem %s0, %s210
        %s212 = smul.u32 4, %s19
      $region28: #{se_layer_cs_forward.3} parent=23 // pred_fallthru
        _
      // Predicated region
      $region29: #{se_layer_cs_forward.3} parent=23 // pred_check
        %p213 = pneg %p71
      $region30: #{se_layer_cs_forward.3} parent=23 // pred_check_branch
        %215 = sbr.rel (%p213) target = $region32
      $region31: #{se_layer_cs_forward.3} parent=23 // pred_region
        %p216 = scmp.lt.s32.totalorder %s18, 1
        %s217 = scalar_select %p216, %s18, 1
        %s218 = smul.addr %s217, 8
        %s219 = scalar_lea.vmem %s1, %s218
      $region32: #{se_layer_cs_forward.3} parent=23 // pred_fallthru
        _
      // Predicated region
      $region33: #{se_layer_cs_forward.3} parent=23 // pred_check
        %p220 = pneg %p99
      $region34: #{se_layer_cs_forward.3} parent=23 // pred_check_branch
        %222 = sbr.rel (%p220) target = $region36
      $region35: #{se_layer_cs_forward.3} parent=23 // pred_region
        %s223 = smul.u32 4, %s19
        %p224 = scmp.lt.s32.totalorder %s18, 1
        %s225 = scalar_select %p224, %s18, 1
        %p226 = scmp.lt.s32.totalorder %s223, 7
        %s227 = scalar_select %p226, %s223, 7
        %s228 = smul.addr %s225, 8
        %s229 = sadd.s32 %s227, %s228
        %s230 = scalar_lea.vmem %s2, %s229
        %s231 = smul.u32 4, %s19
      $region36: #{se_layer_cs_forward.3} parent=23 // pred_fallthru
        _
    $region24: #{se_layer_cs_forward.3} parent=5 // pred_fallthru
      _
    %p232 = scmp.le.s32.totalorder 1, %s11
    %p233 = scmp.lt.s32.totalorder %s11, 5
    %p234 = pnand %p232, %p233
    %p235 = pneg %p234
    // Predicated region
    $region37: #{se_layer_cs_forward.3} parent=5 // pred_check
      _
    $region38: #{se_layer_cs_forward.3} parent=5 // pred_check_branch
      %237 = sbr.rel (%p234) target = $region40
    $region39: #{se_layer_cs_forward.3} parent=5 // pred_region
      %s238 = ssub.s32 %s11, 1
      %s239 = smul.u32 4, %s21
      %p240 = scmp.lt.s32.totalorder %s20, 1
      %s241 = scalar_select %p240, %s20, 1
      %p242 = scmp.lt.s32.totalorder %s239, 7
      %s243 = scalar_select %p242, %s239, 7
      %s244 = smul.addr %s241, 8
      %s245 = sadd.s32 %s243, %s244
      %s246 = smul.addr %s245, 8
      %s247 = scalar_lea.vmem %s0, %s246
      %p248 = pneg %p51
      %p249 = pneg %p48
      %p250 = scmp.lt.s32.totalorder %s20, 1
      %s251 = scalar_select %p250, %s20, 1
      %s252 = smul.addr %s251, 8
      %s253 = scalar_lea.vmem %s1, %s252
      %p254 = pneg %p77
      %p255 = pneg %p74
      %s256 = smul.u32 4, %s21
      %p257 = scmp.lt.s32.totalorder %s20, 1
      %s258 = scalar_select %p257, %s20, 1
      %p259 = scmp.lt.s32.totalorder %s256, 7
      %s260 = scalar_select %p259, %s256, 7
      %s261 = smul.addr %s258, 8
      %s262 = sadd.s32 %s260, %s261
      %s263 = scalar_lea.vmem %s2, %s262
      %p264 = pneg %p105
      %p265 = pneg %p102
      %p266 = pneg %p126
      %p267 = pneg %p123
      %p268 = pneg %p147
      %p269 = pneg %p144
      %p270 = pneg %p175
      %p271 = pneg %p172
      %s272 = smul.u32 4, %s21
      %p273 = scmp.lt.s32.totalorder %s20, 1
      %s274 = scalar_select %p273, %s20, 1
      %p275 = scmp.lt.s32.totalorder %s272, 7
      %s276 = scalar_select %p275, %s272, 7
      %s277 = smul.addr %s274, 8
      %s278 = sadd.s32 %s276, %s277
      %s279 = smul.addr %s278, 8
      %s280 = scalar_lea.vmem %s5, %s279
      %s281 = smul.u32 4, %s21
      %p282 = scmp.lt.s32.totalorder %s20, 1
      %s283 = scalar_select %p282, %s20, 1
      %p284 = scmp.lt.s32.totalorder %s281, 7
      %s285 = scalar_select %p284, %s281, 7
      %s286 = smul.addr %s283, 8
      %s287 = sadd.s32 %s285, %s286
      %s288 = smul.addr %s287, 8
      %s289 = scalar_lea.vmem %s0, %s288
      %s290 = smul.u32 4, %s21
      %p291 = scmp.lt.s32.totalorder %s20, 1
      %s292 = scalar_select %p291, %s20, 1
      %s293 = smul.addr %s292, 8
      %s294 = scalar_lea.vmem %s1, %s293
      %s295 = smul.u32 4, %s21
      %p296 = scmp.lt.s32.totalorder %s20, 1
      %s297 = scalar_select %p296, %s20, 1
      %p298 = scmp.lt.s32.totalorder %s295, 7
      %s299 = scalar_select %p298, %s295, 7
      %s300 = smul.addr %s297, 8
      %s301 = sadd.s32 %s299, %s300
      %s302 = scalar_lea.vmem %s2, %s301
      %s303 = smul.u32 4, %s21
      %s304 = smul.u32 4, %s21
      %p305 = scmp.lt.s32.totalorder %s20, 1
      %s306 = scalar_select %p305, %s20, 1
      %p307 = scmp.lt.s32.totalorder %s304, 7
      %s308 = scalar_select %p307, %s304, 7
      %s309 = smul.addr %s306, 8
      %s310 = sadd.s32 %s308, %s309
      %s311 = smul.addr %s310, 8
      %s312 = scalar_lea.vmem %s5, %s311
      %s313 = smul.u32 4, %s21
      %v314 = vld [vmem:[%s289] sm:$0xff]
      %v315 = vld [vmem:[%s289 + $0x8] sm:$0xff]
      %v316 = vld [vmem:[%s289 + $0x10] sm:$0xff]
      %v317 = vld [vmem:[%s289 + $0x18] sm:$0xff]
      %v318 = vld [vmem:[%s294] sm:$0xff]
      %v319 = vld [vmem:[%s302] sm:$0xf]
      %v320 = vld [vmem:[%s3] sm:$0xff]
      %322 = vset.pattern.permute.xlu0 0
      %323 = vperm.xlu0 %322, %v320
      %v324 = vpop.permute.xlu0 %323
      %v327 = vperm.slane %v319, 0
      %v328 = vperm.slane %v319, 1
      %v329 = vperm.slane %v319, 2
      %v330 = vperm.slane %v319, 3
      %v335 = vmul.f32 %v324, %v327
      %v336 = vmul.f32 %v324, %v328
      %v337 = vmul.f32 %v324, %v329
      %v338 = vmul.f32 %v324, %v330
      %v339 = vld [vmem:[%s4] sm:$0xff]
      %341 = vset.pattern.permute.xlu0 0
      %342 = vperm.xlu0 %341, %v339
      %v343 = vpop.permute.xlu0 %342
      %v345 = vadd.f32 %v335, %v343
      %v346 = vadd.f32 %v336, %v343
      %v347 = vadd.f32 %v337, %v343
      %v348 = vadd.f32 %v338, %v343
      %v349 = vsub.f32 0.0, %v345
      %v350 = vsub.f32 0.0, %v346
      %v351 = vsub.f32 0.0, %v347
      %v352 = vsub.f32 0.0, %v348
      %v353 = vmul.f32 %v349, 1.442695
      %v354 = vpow.pop %v353
      %v355 = vmul.f32 %v350, 1.442695
      %v356 = vpow.pop %v355
      %v357 = vmul.f32 %v351, 1.442695
      %v358 = vpow.pop %v357
      %v359 = vmul.f32 %v352, 1.442695
      %v360 = vpow.pop %v359
      %v361 = vadd.f32 %v354, 1.0
      %v362 = vadd.f32 %v356, 1.0
      %v363 = vadd.f32 %v358, 1.0
      %v364 = vadd.f32 %v360, 1.0
      %v365 = vrcp.pop %v361
      %v366 = vrcp.pop %v362
      %v367 = vrcp.pop %v363
      %v368 = vrcp.pop %v364
      %370 = vset.pattern.permute.xlu0 0
      %371 = vperm.xlu0 %370, %v318
      %v372 = vpop.permute.xlu0 %371
      %v374 = vadd.f32 %v372, %v365
      %v375 = vadd.f32 %v372, %v366
      %v376 = vadd.f32 %v372, %v367
      %v377 = vadd.f32 %v372, %v368
      %v378 = vmul.f32 %v314, %v374
      %v379 = vmul.f32 %v315, %v375
      %v380 = vmul.f32 %v316, %v376
      %v381 = vmul.f32 %v317, %v377
      %382 = vst [vmem:[%s312] sm:$0xff] %v378
      %383 = vst [vmem:[%s312 + $0x8] sm:$0xff] %v379
      %384 = vst [vmem:[%s312 + $0x10] sm:$0xff] %v380
      %385 = vst [vmem:[%s312 + $0x18] sm:$0xff] %v381
      %s386 = smul.u32 4, %s21
      %p387 = scmp.lt.s32.totalorder %s20, 1
      %s388 = scalar_select %p387, %s20, 1
      %p389 = scmp.lt.s32.totalorder %s386, 7
      %s390 = scalar_select %p389, %s386, 7
      %s391 = smul.addr %s388, 8
      %s392 = sadd.s32 %s390, %s391
      %s393 = smul.addr %s392, 8
      %s394 = scalar_lea.vmem %s5, %s393
      // Predicated region
      $region41: #{se_layer_cs_forward.3} parent=39 // pred_check
        %p395 = pneg %p172
      $region42: #{se_layer_cs_forward.3} parent=39 // pred_check_branch
        %397 = sbr.rel (%p395) target = $region44
      $region43: #{se_layer_cs_forward.3} parent=39 // pred_region
        %s398 = smul.u32 4, %s21
      $region44: #{se_layer_cs_forward.3} parent=39 // pred_fallthru
        _
    $region40: #{se_layer_cs_forward.3} parent=5 // pred_fallthru
      _
    %p399 = scmp.le.s32.totalorder 2, %s11
    // Predicated region
    $region45: #{se_layer_cs_forward.3} parent=5 // pred_check
      %p400 = pneg %p399
    $region46: #{se_layer_cs_forward.3} parent=5 // pred_check_branch
      %402 = sbr.rel (%p400) target = $region48
    $region47: #{se_layer_cs_forward.3} parent=5 // pred_region
      %s403 = ssub.s32 %s11, 2
      // Predicated region
      $region49: #{se_layer_cs_forward.3} parent=47 // pred_check
        %p404 = pneg %p178
      $region50: #{se_layer_cs_forward.3} parent=47 // pred_check_branch
        %406 = sbr.rel (%p404) target = $region52
      $region51: #{se_layer_cs_forward.3} parent=47 // pred_region
        %s407 = smul.u32 4, %s23
        %p408 = scmp.lt.s32.totalorder %s22, 1
        %s409 = scalar_select %p408, %s22, 1
        %p410 = scmp.lt.s32.totalorder %s407, 7
        %s411 = scalar_select %p410, %s407, 7
        %s412 = smul.addr %s409, 8
        %s413 = sadd.s32 %s411, %s412
        %s414 = smul.addr %s413, 8
        %s415 = scalar_lea.vmem %s5, %s414
      $region52: #{se_layer_cs_forward.3} parent=47 // pred_fallthru
        _
    $region48: #{se_layer_cs_forward.3} parent=5 // pred_fallthru
      _
  $region6: #{se_layer_cs_forward.3} parent=0 // loop_footer
    %s15 = sadd.s32 1, %s11
  $region7: #{se_layer_cs_forward.3} parent=0 // loop_footer_branch
    %10 = sbr.rel target = $region3
  $region8: #{se_layer_cs_forward.3} parent=0 // loop_exit
    _

</llo_original>
